<compile_context>
chip_gen: v5e
topology: v5e:2x2
jax: 0.10.0
libtpu: 0.0.40
codegen_flags: <defaults>
</compile_context>

<pallas_src>
import functools
import math

import jax
import jax.numpy as jnp
from jax import lax
from jax.experimental import pallas as pl
from jax.experimental.pallas import tpu as pltpu


_VMEM = pl.BlockSpec(memory_space=pltpu.MemorySpace.VMEM)


# ----------------------------- BiGRU kernel ---------------------------------

def _bigru_kernel(x_ref, wih_ref, bih_ref, whhf_ref, bhhf_ref, whhb_ref, bhhb_ref,
                  o_ref, xp_sc, hf_sc, hb_sc):
    """Whole bidirectional GRU in one kernel, vectorized over batch.

    x_ref: (B, T, d_in); wih_ref: (d_in, 6H) bf16 = [W_ih_fwd.T | W_ih_bwd.T];
    whh*_ref: (H, 3H) f32.  Output (B, T, 2H) = [forward | backward] along features.
    Gate order matches PyTorch: [r | z | n].
    """
    B, T, d_in = x_ref.shape
    H = whhf_ref.shape[0]

    # 1) Input projection for all (b, t) and both directions: ONE bf16 matmul, f32 accum.
    #    (not part of the error-accumulating recurrence -> bf16 inputs are safe)
    x2 = x_ref[...].reshape(B * T, d_in).astype(jnp.bfloat16)
    xp = jnp.dot(x2, wih_ref[...], preferred_element_type=jnp.float32) + bih_ref[...]
    xp_sc[...] = xp                                                   # (B*T, 6H), row = b*T + t

    whhf = whhf_ref[...]
    bhhf = bhhf_ref[...]
    whhb = whhb_ref[...]
    bhhb = bhhb_ref[...]

    def gates(xg, gh, h):                                             # all (B, ...) f32
        r = jax.nn.sigmoid(xg[:, 0:H] + gh[:, 0:H])
        z = jax.nn.sigmoid(xg[:, H:2 * H] + gh[:, H:2 * H])
        n = jnp.tanh(xg[:, 2 * H:3 * H] + r * gh[:, 2 * H:3 * H])
        return (1.0 - z) * n + z * h

    def xgate(t, lo, hi):
        # gather the (B, 3H) slab of pre-projected inputs for time t / feature range [lo, hi)
        return jnp.concatenate(
            [xp_sc[pl.ds(b * T + t, 1), lo:hi] for b in range(B)], axis=0)

    def step(t, carry):
        hf, hb = carry
        tb = T - 1 - t
        # forward direction, time t           (recurrence kept in f32)
        ghf = jnp.dot(hf, whhf, preferred_element_type=jnp.float32) + bhhf
        hf = gates(xgate(t, 0, 3 * H), ghf, hf)
        # backward direction, time T-1-t
        ghb = jnp.dot(hb, whhb, preferred_element_type=jnp.float32) + bhhb
        hb = gates(xgate(tb, 3 * H, 6 * H), ghb, hb)
        for b in range(B):                                            # B is small & static
            hf_sc[pl.ds(b * T + t, 1), :] = hf[b:b + 1, :]
            hb_sc[pl.ds(b * T + tb, 1), :] = hb[b:b + 1, :]
        return hf, hb

    h0 = jnp.zeros((B, H), jnp.float32)
    lax.fori_loop(0, T, step, (h0, h0))

    # 2) Assemble output once: [fwd | bwd] along features, single full-block store.
    o_ref[...] = jnp.concatenate([hf_sc[...], hb_sc[...]], axis=1).reshape(B, T, 2 * H)


def pallas_bigru(X, g):
    B, T, _ = X.shape
    H = g["whhf_T"].shape[0]
    return pl.pallas_call(
        _bigru_kernel,
        out_shape=jax.ShapeDtypeStruct((B, T, 2 * H), jnp.float32),
        in_specs=[_VMEM] * 7,
        out_specs=_VMEM,
        scratch_shapes=[
            pltpu.VMEM((B * T, 6 * H), jnp.float32),   # pre-projected inputs
            pltpu.VMEM((B * T, H), jnp.float32),       # forward hidden states
            pltpu.VMEM((B * T, H), jnp.float32),       # backward hidden states
        ],
    )(X, g["wih"], g["bih"], g["whhf_T"], g["bhhf"], g["whhb_T"], g["bhhb"])


# ------------------------ fused encoder-layer stack -------------------------

def _encoder_stack_kernel(x_ref, mask_ref,
                          ln0a_ref, ln0b_ref, wqkv_ref, bqkv_ref, wo_ref, bo_ref,
                          ln1a_ref, ln1b_ref, w1_ref, b1_ref, w2_ref, b2_ref,
                          o_ref, attn_ref, xs_ref, *, heads, eps):
    """grid = (B, n_layers). One grid step = one pre-norm EncoderLayer for one batch row.

    The residual stream stays in the VMEM scratch `xs_ref` across the layer axis; per-layer
    weights arrive via the BlockSpec pipeline (leading layer axis).  Outputs are only
    written on the last layer.
    """
    l = pl.program_id(1)
    T, D = xs_ref.shape
    dk = D // heads

    @pl.when(l == 0)
    def _():
        xs_ref[...] = x_ref[0]                                        # load this batch row

    x2 = xs_ref[...]                                                  # (T, D) f32

    def layer_norm(v, a, b):
        # reference LayerNorm: unbiased std, divide by (std + eps)
        mean = jnp.mean(v, axis=-1, keepdims=True)
        c = v - mean
        var = jnp.sum(c * c, axis=-1, keepdims=True) * (1.0 / (D - 1))
        inv = pl.reciprocal(jnp.sqrt(var) + eps, approx=True)
        return a * (c * inv) + b

    def mxu(a, w_bf16):                                               # bf16 MXU, f32 accum
        return jnp.dot(a.astype(jnp.bfloat16), w_bf16, preferred_element_type=jnp.float32)

    # ---- sublayer 0: x + Wo @ SelfAttn(LN0(x)) ----
    xn = layer_norm(x2, ln0a_ref[0], ln0b_ref[0])
    qkv = mxu(xn, wqkv_ref[0]) + bqkv_ref[0]                          # (T, 3D); 1/sqrt(dk) folded into Wq

    # batch the per-head matmuls over the head axis (2 batched dots instead of 2*heads)
    qh = jnp.stack([qkv[:, h * dk:(h + 1) * dk] for h in range(heads)],
                   axis=0).astype(jnp.bfloat16)                       # (heads, T, dk)
    kh = jnp.stack([qkv[:, D + h * dk:D + (h + 1) * dk] for h in range(heads)],
                   axis=0).astype(jnp.bfloat16)
    vh = jnp.stack([qkv[:, 2 * D + h * dk:2 * D + (h + 1) * dk] for h in range(heads)],
                   axis=0).astype(jnp.bfloat16)

    s = jnp.einsum('hqd,hkd->hqk', qh, kh,
                   preferred_element_type=jnp.float32)                # (heads, T, T)
    keep = mask_ref[0] != 0.0                                         # (1, T) — hoisted, once per row
    s = jnp.where(keep[None, :, :], s, -1e9)                          # masked_fill(mask==0, -1e9)
    s = s - jnp.max(s, axis=-1, keepdims=True)
    e = jnp.exp(s)
    p = e / jnp.sum(e, axis=-1, keepdims=True)                        # exact softmax (returned as attn)
    ctx_h = jnp.einsum('hqk,hkd->hqd', p.astype(jnp.bfloat16), vh,
                       preferred_element_type=jnp.float32)            # (heads, T, dk)
    ctx = jnp.concatenate([ctx_h[h] for h in range(heads)], axis=1)   # (T, D)

    x2 = mxu(ctx, wo_ref[0]) + bo_ref[0] + x2                         # residual

    # ---- sublayer 1: x + FFN(LN1(x)) ----
    xn = layer_norm(x2, ln1a_ref[0], ln1b_ref[0])
    h1 = jnp.maximum(mxu(xn, w1_ref[0]) + b1_ref[0], 0.0)
    x2 = mxu(h1, w2_ref[0]) + b2_ref[0] + x2                          # residual

    xs_ref[...] = x2                                                  # residual stream stays in VMEM

    @pl.when(l == pl.num_programs(1) - 1)
    def _():
        o_ref[0] = x2                                                 # single full-block stores
        attn_ref[0] = p


def pallas_encoder_stack(x, mask3, p):
    B, T, D = x.shape
    L = p["wqkv"].shape[0]
    heads = p["heads"]
    d_ff = p["w1"].shape[-1]

    def bmap(b, l):
        return (b, 0, 0)

    def wmap(b, l):
        return (l, 0, 0)

    in_specs = [
        pl.BlockSpec((1, T, D), bmap),                 # x (read at l==0 only)
        pl.BlockSpec((1, 1, T), bmap),                 # mask
        pl.BlockSpec((1, 1, D), wmap),                 # ln0_a
        pl.BlockSpec((1, 1, D), wmap),                 # ln0_b
        pl.BlockSpec((1, D, 3 * D), wmap),             # wqkv (bf16, Q pre-scaled)
        pl.BlockSpec((1, 1, 3 * D), wmap),             # bqkv
        pl.BlockSpec((1, D, D), wmap),                 # wo
        pl.BlockSpec((1, 1, D), wmap),                 # bo
        pl.BlockSpec((1, 1, D), wmap),                 # ln1_a
        pl.BlockSpec((1, 1, D), wmap),                 # ln1_b
        pl.BlockSpec((1, D, d_ff), wmap),              # w1
        pl.BlockSpec((1, 1, d_ff), wmap),              # b1
        pl.BlockSpec((1, d_ff, D), wmap),              # w2
        pl.BlockSpec((1, 1, D), wmap),                 # b2
    ]
    out_specs = (
        pl.BlockSpec((1, T, D), lambda b, l: (b, 0, 0)),
        pl.BlockSpec((1, heads, T, T), lambda b, l: (b, 0, 0, 0)),
    )
    out_shape = (
        jax.ShapeDtypeStruct((B, T, D), jnp.float32),
        jax.ShapeDtypeStruct((B, heads, T, T), jnp.float32),
    )
    kernel = functools.partial(_encoder_stack_kernel, heads=heads, eps=1e-6)
    return pl.pallas_call(
        kernel,
        out_shape=out_shape,
        grid_spec=pltpu.PrefetchScalarGridSpec(
            num_scalar_prefetch=0,
            grid=(B, L),                               # batch parallel, layers sequential
            in_specs=in_specs,
            out_specs=out_specs,
            scratch_shapes=[pltpu.VMEM((T, D), jnp.float32)],   # resident residual stream
        ),
        compiler_params=pltpu.CompilerParams(
            dimension_semantics=("parallel", "arbitrary")),
    )(x, mask3,
      p["ln0_a"], p["ln0_b"], p["wqkv"], p["bqkv"], p["wo"], p["bo"],
      p["ln1_a"], p["ln1_b"], p["w1"], p["b1"], p["w2"], p["b2"])


# --------------------------- model forward pass -----------------------------

def encoder_forward(X, mask, params):
    x = pallas_bigru(X, params["gru"])
    x, attn = pallas_encoder_stack(x, mask, params["layers"])
    # NOTE: reference Encoder.forward does NOT apply self.norm before returning.
    return x, attn


# ------------------------------ parameters ----------------------------------

def init_params(key, d_in, d_h, d_model, n_layers, heads, d_ff):
    keys = iter(jax.random.split(key, 64))

    def w(shape, scale):
        return jax.random.normal(next(keys), shape, jnp.float32) * scale

    H = d_h
    # PyTorch-layout GRU weights, then fused / transposed once for the kernel.
    w_ih_f = w((3 * H, d_in), 1.0 / math.sqrt(d_in))
    w_ih_b = w((3 * H, d_in), 1.0 / math.sqrt(d_in))
    w_hh_f = w((3 * H, H), 1.0 / math.sqrt(H))
    w_hh_b = w((3 * H, H), 1.0 / math.sqrt(H))
    b_ih_f = w((3 * H,), 0.1)
    b_ih_b = w((3 * H,), 0.1)
    b_hh_f = w((3 * H,), 0.1)
    b_hh_b = w((3 * H,), 0.1)
    gru = dict(
        # input projection runs in bf16 (not part of the recurrence) -> pre-cast weight
        wih=jnp.concatenate([w_ih_f.T, w_ih_b.T], axis=1).astype(jnp.bfloat16),   # (d_in, 6H)
        bih=jnp.concatenate([b_ih_f, b_ih_b]).reshape(1, 6 * H),
        whhf_T=w_hh_f.T, bhhf=b_hh_f.reshape(1, 3 * H),
        whhb_T=w_hh_b.T, bhhb=b_hh_b.reshape(1, 3 * H),
    )

    dk = d_model // heads
    s = 1.0 / math.sqrt(d_model)
    wqkv_l, wo_l, w1_l, w2_l = [], [], [], []
    for _ in range(n_layers):
        # 1/sqrt(dk) attention scale folded into Wq (would also apply to the Q bias,
        # which is zero here).
        wq = w((d_model, d_model), s) * (1.0 / math.sqrt(dk))
        wk = w((d_model, d_model), s)
        wv = w((d_model, d_model), s)
        wqkv_l.append(jnp.concatenate([wq, wk, wv], axis=1))          # (D, 3D)
        wo_l.append(w((d_model, d_model), s))
        w1_l.append(w((d_model, d_ff), s))
        w2_l.append(w((d_ff, d_model), 1.0 / math.sqrt(d_ff)))

    layers = dict(
        heads=heads,
        # per-layer weights stacked on a leading layer axis; MXU weights pre-cast to bf16
        wqkv=jnp.stack(wqkv_l).astype(jnp.bfloat16),                  # (L, D, 3D)
        bqkv=jnp.zeros((n_layers, 1, 3 * d_model), jnp.float32),
        wo=jnp.stack(wo_l).astype(jnp.bfloat16),                      # (L, D, D)
        bo=jnp.zeros((n_layers, 1, d_model), jnp.float32),
        w1=jnp.stack(w1_l).astype(jnp.bfloat16),                      # (L, D, d_ff)
        b1=jnp.zeros((n_layers, 1, d_ff), jnp.float32),
        w2=jnp.stack(w2_l).astype(jnp.bfloat16),                      # (L, d_ff, D)
        b2=jnp.zeros((n_layers, 1, d_model), jnp.float32),
        ln0_a=jnp.ones((n_layers, 1, d_model), jnp.float32),
        ln0_b=jnp.zeros((n_layers, 1, d_model), jnp.float32),
        ln1_a=jnp.ones((n_layers, 1, d_model), jnp.float32),
        ln1_b=jnp.zeros((n_layers, 1, d_model), jnp.float32),
    )
    # TODO(synk): dropout (GRU inter-layer + sublayer dropout) is identity at inference; not modeled.
    return dict(gru=gru, layers=layers)


# --------------------------------- main --------------------------------------

if __name__ == "__main__":
    B, T, d_in, d_h = 2, 8, 16, 16
    d_model = 2 * d_h          # bidirectional GRU output width == layer.size
    n_layers, heads, d_ff = 2, 4, 64

    key = jax.random.PRNGKey(0)
    kx, kp = jax.random.split(key)
    X = jax.random.normal(kx, (B, T, d_in), jnp.float32)
    mask = jnp.ones((B, 1, T), jnp.float32).at[1, 0, T - 2:].set(0.0)

    params = init_params(kp, d_in, d_h, d_model, n_layers, heads, d_ff)

    fwd = jax.jit(lambda x_in, m_in: encoder_forward(x_in, m_in, params))
    out, attn = fwd(X, mask)
    jax.block_until_ready((out, attn))

    assert out.shape == (B, T, d_model), out.shape
    assert attn.shape == (B, heads, T, T), attn.shape
    assert bool(jnp.all(jnp.isfinite(out))) and bool(jnp.all(jnp.isfinite(attn)))
    print("KERNEL_OK")
</pallas_src>

<mosaic_0001>
module attributes {stable_mosaic.version = 11 : i64} {
  func.func @_bigru_kernel(%arg0: memref<2x8x16xf32, #tpu.memory_space<vmem>>, %arg1: memref<16x96xbf16, #tpu.memory_space<vmem>>, %arg2: memref<1x96xf32, #tpu.memory_space<vmem>>, %arg3: memref<16x48xf32, #tpu.memory_space<vmem>>, %arg4: memref<1x48xf32, #tpu.memory_space<vmem>>, %arg5: memref<16x48xf32, #tpu.memory_space<vmem>>, %arg6: memref<1x48xf32, #tpu.memory_space<vmem>>, %arg7: memref<2x8x32xf32, #tpu.memory_space<vmem>>, %arg8: memref<16x96xf32, #tpu.memory_space<vmem>>, %arg9: memref<16x16xf32, #tpu.memory_space<vmem>>, %arg10: memref<16x16xf32, #tpu.memory_space<vmem>>) attributes {dimension_semantics = [], scalar_prefetch = 0 : i64, scratch_operands = 3 : i64, tpu.core_type = #tpu.core_type<tc>} {
    %c0 = arith.constant 0 : index
    %c0_0 = arith.constant 0 : index
    %c0_1 = arith.constant 0 : index
    %0 = vector.load %arg0[%c0, %c0_0, %c0_1] : memref<2x8x16xf32, #tpu.memory_space<vmem>>, vector<2x8x16xf32>
    %1 = vector.shape_cast %0 : vector<2x8x16xf32> to vector<16x16xf32>
    %2 = arith.truncf %1 : vector<16x16xf32> to vector<16x16xbf16>
    %c0_2 = arith.constant 0 : index
    %c0_3 = arith.constant 0 : index
    %3 = vector.load %arg1[%c0_2, %c0_3] : memref<16x96xbf16, #tpu.memory_space<vmem>>, vector<16x96xbf16>
    %cst = arith.constant dense<0.000000e+00> : vector<16x96xf32>
    %4 = tpu.matmul %2, %3, %cst {dimension_numbers = #tpu.dot_dimension_numbers<[1], [0], [0], [1], [0, 0, 1, 1], [], []>} : vector<16x16xbf16>, vector<16x96xbf16>, vector<16x96xf32> -> vector<16x96xf32>
    %c0_4 = arith.constant 0 : index
    %c0_5 = arith.constant 0 : index
    %5 = vector.load %arg2[%c0_4, %c0_5] : memref<1x96xf32, #tpu.memory_space<vmem>>, vector<1x96xf32>
    %6 = vector.broadcast %5 : vector<1x96xf32> to vector<16x96xf32>
    %7 = arith.addf %4, %6 : vector<16x96xf32>
    %c0_6 = arith.constant 0 : index
    %c0_7 = arith.constant 0 : index
    %8 = vector.load %arg8[%c0_6, %c0_7] : memref<16x96xf32, #tpu.memory_space<vmem>>, vector<16x96xf32>
    tpu.vector_store %arg8[%c0_6, %c0_7], %7 {strides = array<i32>} : memref<16x96xf32, #tpu.memory_space<vmem>>, vector<16x96xf32>,
    %c0_8 = arith.constant 0 : index
    %c0_9 = arith.constant 0 : index
    %9 = vector.load %arg3[%c0_8, %c0_9] : memref<16x48xf32, #tpu.memory_space<vmem>>, vector<16x48xf32>
    %c0_10 = arith.constant 0 : index
    %c0_11 = arith.constant 0 : index
    %10 = vector.load %arg4[%c0_10, %c0_11] : memref<1x48xf32, #tpu.memory_space<vmem>>, vector<1x48xf32>
    %c0_12 = arith.constant 0 : index
    %c0_13 = arith.constant 0 : index
    %11 = vector.load %arg5[%c0_12, %c0_13] : memref<16x48xf32, #tpu.memory_space<vmem>>, vector<16x48xf32>
    %c0_14 = arith.constant 0 : index
    %c0_15 = arith.constant 0 : index
    %12 = vector.load %arg6[%c0_14, %c0_15] : memref<1x48xf32, #tpu.memory_space<vmem>>, vector<1x48xf32>
    %cst_16 = arith.constant 0.000000e+00 : f32
    %13 = vector.broadcast %cst_16 : f32 to vector<2x16xf32>
    %c0_i32 = arith.constant 0 : i32
    %c8_i32 = arith.constant 8 : i32
    %14 = arith.addi %c0_i32, %c8_i32 : i32
    %c1_i32 = arith.constant 1 : i32
    %15:2 = scf.for %arg11 = %c0_i32 to %14 step %c1_i32 iter_args(%arg12 = %13, %arg13 = %13) -> (vector<2x16xf32>, vector<2x16xf32>)  : i32 {
      %c7_i32 = arith.constant 7 : i32
      %21 = arith.subi %c7_i32, %arg11 : i32
      %cst_25 = arith.constant dense<0.000000e+00> : vector<2x48xf32>
      %22 = tpu.matmul %arg12, %9, %cst_25 {dimension_numbers = #tpu.dot_dimension_numbers<[1], [0], [0], [1], [0, 0, 1, 1], [], []>} : vector<2x16xf32>, vector<16x48xf32>, vector<2x48xf32> -> vector<2x48xf32>
      %23 = vector.broadcast %10 : vector<1x48xf32> to vector<2x48xf32>
      %24 = arith.addf %22, %23 : vector<2x48xf32>
      %c0_i32_26 = arith.constant 0 : i32
      %25 = arith.addi %c0_i32_26, %arg11 : i32
      %26 = arith.index_cast %25 : i32 to index
      %c0_27 = arith.constant 0 : index
      %27 = vector.load %arg8[%26, %c0_27] : memref<16x96xf32, #tpu.memory_space<vmem>>, vector<1x48xf32>
      %c8_i32_28 = arith.constant 8 : i32
      %28 = arith.addi %c8_i32_28, %arg11 : i32
      %29 = arith.index_cast %28 : i32 to index
      %c0_29 = arith.constant 0 : index
      %30 = vector.load %arg8[%29, %c0_29] : memref<16x96xf32, #tpu.memory_space<vmem>>, vector<1x48xf32>
      %31 = tpu.concatenate %27, %30 in 0 : vector<1x48xf32>, vector<1x48xf32> -> vector<2x48xf32>
      %32 = vector.extract_strided_slice %31 {offsets = [0, 0], sizes = [2, 16], strides = [1, 1]} : vector<2x48xf32> to vector<2x16xf32>
      %33 = vector.extract_strided_slice %24 {offsets = [0, 0], sizes = [2, 16], strides = [1, 1]} : vector<2x48xf32> to vector<2x16xf32>
      %34 = arith.addf %32, %33 : vector<2x16xf32>
      %35 = arith.negf %34 : vector<2x16xf32>
      %36 = math.exp %35 : vector<2x16xf32>
      %cst_30 = arith.constant 1.000000e+00 : f32
      %37 = vector.broadcast %cst_30 : f32 to vector<2x16xf32>
      %38 = arith.addf %37, %36 : vector<2x16xf32>
      %39 = arith.divf %37, %38 : vector<2x16xf32>
      %40 = vector.extract_strided_slice %31 {offsets = [0, 16], sizes = [2, 16], strides = [1, 1]} : vector<2x48xf32> to vector<2x16xf32>
      %41 = vector.extract_strided_slice %24 {offsets = [0, 16], sizes = [2, 16], strides = [1, 1]} : vector<2x48xf32> to vector<2x16xf32>
      %42 = arith.addf %40, %41 : vector<2x16xf32>
      %43 = arith.negf %42 : vector<2x16xf32>
      %44 = math.exp %43 : vector<2x16xf32>
      %cst_31 = arith.constant 1.000000e+00 : f32
      %45 = vector.broadcast %cst_31 : f32 to vector<2x16xf32>
      %46 = arith.addf %45, %44 : vector<2x16xf32>
      %47 = arith.divf %45, %46 : vector<2x16xf32>
      %48 = vector.extract_strided_slice %31 {offsets = [0, 32], sizes = [2, 16], strides = [1, 1]} : vector<2x48xf32> to vector<2x16xf32>
      %49 = vector.extract_strided_slice %24 {offsets = [0, 32], sizes = [2, 16], strides = [1, 1]} : vector<2x48xf32> to vector<2x16xf32>
      %50 = arith.mulf %39, %49 : vector<2x16xf32>
      %51 = arith.addf %48, %50 : vector<2x16xf32>
      %52 = math.tanh %51 : vector<2x16xf32>
      %cst_32 = arith.constant 1.000000e+00 : f32
      %53 = vector.broadcast %cst_32 : f32 to vector<2x16xf32>
      %54 = arith.subf %53, %47 : vector<2x16xf32>
      %55 = arith.mulf %54, %52 : vector<2x16xf32>
      %56 = arith.mulf %47, %arg12 : vector<2x16xf32>
      %57 = arith.addf %55, %56 : vector<2x16xf32>
      %cst_33 = arith.constant dense<0.000000e+00> : vector<2x48xf32>
      %58 = tpu.matmul %arg13, %11, %cst_33 {dimension_numbers = #tpu.dot_dimension_numbers<[1], [0], [0], [1], [0, 0, 1, 1], [], []>} : vector<2x16xf32>, vector<16x48xf32>, vector<2x48xf32> -> vector<2x48xf32>
      %59 = vector.broadcast %12 : vector<1x48xf32> to vector<2x48xf32>
      %60 = arith.addf %58, %59 : vector<2x48xf32>
      %c0_i32_34 = arith.constant 0 : i32
      %61 = arith.addi %c0_i32_34, %21 : i32
      %62 = arith.index_cast %61 : i32 to index
      %c48 = arith.constant 48 : index
      %63 = vector.load %arg8[%62, %c48] : memref<16x96xf32, #tpu.memory_space<vmem>>, vector<1x48xf32>
      %c8_i32_35 = arith.constant 8 : i32
      %64 = arith.addi %c8_i32_35, %21 : i32
      %65 = arith.index_cast %64 : i32 to index
      %c48_36 = arith.constant 48 : index
      %66 = vector.load %arg8[%65, %c48_36] : memref<16x96xf32, #tpu.memory_space<vmem>>, vector<1x48xf32>
      %67 = tpu.concatenate %63, %66 in 0 : vector<1x48xf32>, vector<1x48xf32> -> vector<2x48xf32>
      %68 = vector.extract_strided_slice %67 {offsets = [0, 0], sizes = [2, 16], strides = [1, 1]} : vector<2x48xf32> to vector<2x16xf32>
      %69 = vector.extract_strided_slice %60 {offsets = [0, 0], sizes = [2, 16], strides = [1, 1]} : vector<2x48xf32> to vector<2x16xf32>
      %70 = arith.addf %68, %69 : vector<2x16xf32>
      %71 = arith.negf %70 : vector<2x16xf32>
      %72 = math.exp %71 : vector<2x16xf32>
      %cst_37 = arith.constant 1.000000e+00 : f32
      %73 = vector.broadcast %cst_37 : f32 to vector<2x16xf32>
      %74 = arith.addf %73, %72 : vector<2x16xf32>
      %75 = arith.divf %73, %74 : vector<2x16xf32>
      %76 = vector.extract_strided_slice %67 {offsets = [0, 16], sizes = [2, 16], strides = [1, 1]} : vector<2x48xf32> to vector<2x16xf32>
      %77 = vector.extract_strided_slice %60 {offsets = [0, 16], sizes = [2, 16], strides = [1, 1]} : vector<2x48xf32> to vector<2x16xf32>
      %78 = arith.addf %76, %77 : vector<2x16xf32>
      %79 = arith.negf %78 : vector<2x16xf32>
      %80 = math.exp %79 : vector<2x16xf32>
      %cst_38 = arith.constant 1.000000e+00 : f32
      %81 = vector.broadcast %cst_38 : f32 to vector<2x16xf32>
      %82 = arith.addf %81, %80 : vector<2x16xf32>
      %83 = arith.divf %81, %82 : vector<2x16xf32>
      %84 = vector.extract_strided_slice %67 {offsets = [0, 32], sizes = [2, 16], strides = [1, 1]} : vector<2x48xf32> to vector<2x16xf32>
      %85 = vector.extract_strided_slice %60 {offsets = [0, 32], sizes = [2, 16], strides = [1, 1]} : vector<2x48xf32> to vector<2x16xf32>
      %86 = arith.mulf %75, %85 : vector<2x16xf32>
      %87 = arith.addf %84, %86 : vector<2x16xf32>
      %88 = math.tanh %87 : vector<2x16xf32>
      %cst_39 = arith.constant 1.000000e+00 : f32
      %89 = vector.broadcast %cst_39 : f32 to vector<2x16xf32>
      %90 = arith.subf %89, %83 : vector<2x16xf32>
      %91 = arith.mulf %90, %88 : vector<2x16xf32>
      %92 = arith.mulf %83, %arg13 : vector<2x16xf32>
      %93 = arith.addf %91, %92 : vector<2x16xf32>
      %94 = vector.extract_strided_slice %57 {offsets = [0, 0], sizes = [1, 16], strides = [1, 1]} : vector<2x16xf32> to vector<1x16xf32>
      %c0_i32_40 = arith.constant 0 : i32
      %95 = arith.addi %c0_i32_40, %arg11 : i32
      %96 = arith.index_cast %95 : i32 to index
      %c0_41 = arith.constant 0 : index
      %97 = vector.load %arg9[%96, %c0_41] : memref<16x16xf32, #tpu.memory_space<vmem>>, vector<1x16xf32>
      tpu.vector_store %arg9[%96, %c0_41], %94 {strides = array<i32>} : memref<16x16xf32, #tpu.memory_space<vmem>>, vector<1x16xf32>,
      %98 = vector.extract_strided_slice %93 {offsets = [0, 0], sizes = [1, 16], strides = [1, 1]} : vector<2x16xf32> to vector<1x16xf32>
      %c0_i32_42 = arith.constant 0 : i32
      %99 = arith.addi %c0_i32_42, %21 : i32
      %100 = arith.index_cast %99 : i32 to index
      %c0_43 = arith.constant 0 : index
      %101 = vector.load %arg10[%100, %c0_43] : memref<16x16xf32, #tpu.memory_space<vmem>>, vector<1x16xf32>
      tpu.vector_store %arg10[%100, %c0_43], %98 {strides = array<i32>} : memref<16x16xf32, #tpu.memory_space<vmem>>, vector<1x16xf32>,
      %102 = vector.extract_strided_slice %57 {offsets = [1, 0], sizes = [1, 16], strides = [1, 1]} : vector<2x16xf32> to vector<1x16xf32>
      %c8_i32_44 = arith.constant 8 : i32
      %103 = arith.addi %c8_i32_44, %arg11 : i32
      %104 = arith.index_cast %103 : i32 to index
      %c0_45 = arith.constant 0 : index
      %105 = vector.load %arg9[%104, %c0_45] : memref<16x16xf32, #tpu.memory_space<vmem>>, vector<1x16xf32>
      tpu.vector_store %arg9[%104, %c0_45], %102 {strides = array<i32>} : memref<16x16xf32, #tpu.memory_space<vmem>>, vector<1x16xf32>,
      %106 = vector.extract_strided_slice %93 {offsets = [1, 0], sizes = [1, 16], strides = [1, 1]} : vector<2x16xf32> to vector<1x16xf32>
      %c8_i32_46 = arith.constant 8 : i32
      %107 = arith.addi %c8_i32_46, %21 : i32
      %108 = arith.index_cast %107 : i32 to index
      %c0_47 = arith.constant 0 : index
      %109 = vector.load %arg10[%108, %c0_47] : memref<16x16xf32, #tpu.memory_space<vmem>>, vector<1x16xf32>
      tpu.vector_store %arg10[%108, %c0_47], %106 {strides = array<i32>} : memref<16x16xf32, #tpu.memory_space<vmem>>, vector<1x16xf32>,
      scf.yield %57, %93 : vector<2x16xf32>, vector<2x16xf32>
    }
    %c8_i32_17 = arith.constant 8 : i32
    %c0_18 = arith.constant 0 : index
    %c0_19 = arith.constant 0 : index
    %16 = vector.load %arg9[%c0_18, %c0_19] : memref<16x16xf32, #tpu.memory_space<vmem>>, vector<16x16xf32>
    %c0_20 = arith.constant 0 : index
    %c0_21 = arith.constant 0 : index
    %17 = vector.load %arg10[%c0_20, %c0_21] : memref<16x16xf32, #tpu.memory_space<vmem>>, vector<16x16xf32>
    %18 = tpu.concatenate %16, %17 in 1 : vector<16x16xf32>, vector<16x16xf32> -> vector<16x32xf32>
    %19 = vector.shape_cast %18 : vector<16x32xf32> to vector<2x8x32xf32>
    %c0_22 = arith.constant 0 : index
    %c0_23 = arith.constant 0 : index
    %c0_24 = arith.constant 0 : index
    %20 = vector.load %arg7[%c0_22, %c0_23, %c0_24] : memref<2x8x32xf32, #tpu.memory_space<vmem>>, vector<2x8x32xf32>
    tpu.vector_store %arg7[%c0_22, %c0_23, %c0_24], %19 {strides = array<i32>} : memref<2x8x32xf32, #tpu.memory_space<vmem>>, vector<2x8x32xf32>,
    return
  }
}

module attributes {stable_mosaic.version = 11 : i64} {
  func.func @_encoder_stack_kernel(%arg0: i32, %arg1: i32, %arg2: memref<1x8x32xf32, #tpu.memory_space<vmem>>, %arg3: memref<1x1x8xf32, #tpu.memory_space<vmem>>, %arg4: memref<1x1x32xf32, #tpu.memory_space<vmem>>, %arg5: memref<1x1x32xf32, #tpu.memory_space<vmem>>, %arg6: memref<1x32x96xbf16, #tpu.memory_space<vmem>>, %arg7: memref<1x1x96xf32, #tpu.memory_space<vmem>>, %arg8: memref<1x32x32xbf16, #tpu.memory_space<vmem>>, %arg9: memref<1x1x32xf32, #tpu.memory_space<vmem>>, %arg10: memref<1x1x32xf32, #tpu.memory_space<vmem>>, %arg11: memref<1x1x32xf32, #tpu.memory_space<vmem>>, %arg12: memref<1x32x64xbf16, #tpu.memory_space<vmem>>, %arg13: memref<1x1x64xf32, #tpu.memory_space<vmem>>, %arg14: memref<1x64x32xbf16, #tpu.memory_space<vmem>>, %arg15: memref<1x1x32xf32, #tpu.memory_space<vmem>>, %arg16: memref<1x8x32xf32, #tpu.memory_space<vmem>>, %arg17: memref<1x4x8x8xf32, #tpu.memory_space<vmem>>, %arg18: memref<8x32xf32, #tpu.memory_space<vmem>>) attributes {dimension_semantics = [#tpu.dimension_semantics<parallel>, #tpu.dimension_semantics<arbitrary>], iteration_bounds = array<i64: 2, 2>, scalar_prefetch = 0 : i64, scratch_operands = 1 : i64, tpu.core_type = #tpu.core_type<tc>, window_params = [{transform_indices = @transform_0, window_bounds = array<i64: 1, 8, 32>}, {transform_indices = @transform_1, window_bounds = array<i64: 1, 1, 8>}, {transform_indices = @transform_2, window_bounds = array<i64: 1, 1, 32>}, {transform_indices = @transform_3, window_bounds = array<i64: 1, 1, 32>}, {transform_indices = @transform_4, window_bounds = array<i64: 1, 32, 96>}, {transform_indices = @transform_5, window_bounds = array<i64: 1, 1, 96>}, {transform_indices = @transform_6, window_bounds = array<i64: 1, 32, 32>}, {transform_indices = @transform_7, window_bounds = array<i64: 1, 1, 32>}, {transform_indices = @transform_8, window_bounds = array<i64: 1, 1, 32>}, {transform_indices = @transform_9, window_bounds = array<i64: 1, 1, 32>}, {transform_indices = @transform_10, window_bounds = array<i64: 1, 32, 64>}, {transform_indices = @transform_11, window_bounds = array<i64: 1, 1, 64>}, {transform_indices = @transform_12, window_bounds = array<i64: 1, 64, 32>}, {transform_indices = @transform_13, window_bounds = array<i64: 1, 1, 32>}, {transform_indices = @transform_14, window_bounds = array<i64: 1, 8, 32>}, {transform_indices = @transform_15, window_bounds = array<i64: 1, 4, 8, 8>}]} {
    %c0_i32 = arith.constant 0 : i32
    %0 = arith.cmpi eq, %arg1, %c0_i32 : i32
    %1 = arith.extui %0 : i1 to i32
    %c0_i32_0 = arith.constant 0 : i32
    %2 = arith.cmpi ne, %1, %c0_i32_0 : i32
    scf.if %2 {
      %c0_64 = arith.constant 0 : index
      %c0_65 = arith.constant 0 : index
      %c0_66 = arith.constant 0 : index
      %154 = vector.load %arg2[%c0_64, %c0_65, %c0_66] : memref<1x8x32xf32, #tpu.memory_space<vmem>>, vector<1x8x32xf32>
      %155 = vector.shape_cast %154 : vector<1x8x32xf32> to vector<8x32xf32>
      %c0_67 = arith.constant 0 : index
      %c0_68 = arith.constant 0 : index
      %156 = vector.load %arg18[%c0_67, %c0_68] : memref<8x32xf32, #tpu.memory_space<vmem>>, vector<8x32xf32>
      tpu.vector_store %arg18[%c0_67, %c0_68], %155 {strides = array<i32>} : memref<8x32xf32, #tpu.memory_space<vmem>>, vector<8x32xf32>,
    } else {
    }
    %c0 = arith.constant 0 : index
    %c0_1 = arith.constant 0 : index
    %3 = vector.load %arg18[%c0, %c0_1] : memref<8x32xf32, #tpu.memory_space<vmem>>, vector<8x32xf32>
    %c0_2 = arith.constant 0 : index
    %c0_3 = arith.constant 0 : index
    %c0_4 = arith.constant 0 : index
    %4 = vector.load %arg4[%c0_2, %c0_3, %c0_4] : memref<1x1x32xf32, #tpu.memory_space<vmem>>, vector<1x1x32xf32>
    %5 = vector.shape_cast %4 : vector<1x1x32xf32> to vector<1x32xf32>
    %c0_5 = arith.constant 0 : index
    %c0_6 = arith.constant 0 : index
    %c0_7 = arith.constant 0 : index
    %6 = vector.load %arg5[%c0_5, %c0_6, %c0_7] : memref<1x1x32xf32, #tpu.memory_space<vmem>>, vector<1x1x32xf32>
    %7 = vector.shape_cast %6 : vector<1x1x32xf32> to vector<1x32xf32>
    %cst = arith.constant dense<0.000000e+00> : vector<8xf32>
    %8 = vector.multi_reduction <add>, %3, %cst [1] : vector<8x32xf32> to vector<8xf32>
    %9 = vector.shape_cast %8 : vector<8xf32> to vector<8x1xf32>
    %cst_8 = arith.constant 3.200000e+01 : f32
    %10 = vector.broadcast %cst_8 : f32 to vector<8x1xf32>
    %11 = arith.divf %9, %10 : vector<8x1xf32>
    %12 = vector.broadcast %11 : vector<8x1xf32> to vector<8x32xf32>
    %13 = arith.subf %3, %12 : vector<8x32xf32>
    %14 = arith.mulf %13, %13 : vector<8x32xf32>
    %cst_9 = arith.constant dense<0.000000e+00> : vector<8xf32>
    %15 = vector.multi_reduction <add>, %14, %cst_9 [1] : vector<8x32xf32> to vector<8xf32>
    %16 = vector.shape_cast %15 : vector<8xf32> to vector<8x1xf32>
    %cst_10 = arith.constant 0.0322580636 : f32
    %17 = vector.broadcast %cst_10 : f32 to vector<8x1xf32>
    %18 = arith.mulf %16, %17 : vector<8x1xf32>
    %19 = math.sqrt %18 : vector<8x1xf32>
    %cst_11 = arith.constant 9.99999997E-7 : f32
    %20 = vector.broadcast %cst_11 : f32 to vector<8x1xf32>
    %21 = arith.addf %19, %20 : vector<8x1xf32>
    %22 = tpu.reciprocal %21 {approx = true} : vector<8x1xf32> -> vector<8x1xf32>
    %23 = vector.broadcast %22 : vector<8x1xf32> to vector<8x32xf32>
    %24 = arith.mulf %13, %23 : vector<8x32xf32>
    %25 = vector.broadcast %5 : vector<1x32xf32> to vector<8x32xf32>
    %26 = arith.mulf %25, %24 : vector<8x32xf32>
    %27 = vector.broadcast %7 : vector<1x32xf32> to vector<8x32xf32>
    %28 = arith.addf %26, %27 : vector<8x32xf32>
    %c0_12 = arith.constant 0 : index
    %c0_13 = arith.constant 0 : index
    %c0_14 = arith.constant 0 : index
    %29 = vector.load %arg6[%c0_12, %c0_13, %c0_14] : memref<1x32x96xbf16, #tpu.memory_space<vmem>>, vector<1x32x96xbf16>
    %30 = vector.shape_cast %29 : vector<1x32x96xbf16> to vector<32x96xbf16>
    %31 = arith.truncf %28 : vector<8x32xf32> to vector<8x32xbf16>
    %cst_15 = arith.constant dense<0.000000e+00> : vector<8x96xf32>
    %32 = tpu.matmul %31, %30, %cst_15 {dimension_numbers = #tpu.dot_dimension_numbers<[1], [0], [0], [1], [0, 0, 1, 1], [], []>} : vector<8x32xbf16>, vector<32x96xbf16>, vector<8x96xf32> -> vector<8x96xf32>
    %c0_16 = arith.constant 0 : index
    %c0_17 = arith.constant 0 : index
    %c0_18 = arith.constant 0 : index
    %33 = vector.load %arg7[%c0_16, %c0_17, %c0_18] : memref<1x1x96xf32, #tpu.memory_space<vmem>>, vector<1x1x96xf32>
    %34 = vector.shape_cast %33 : vector<1x1x96xf32> to vector<1x96xf32>
    %35 = vector.broadcast %34 : vector<1x96xf32> to vector<8x96xf32>
    %36 = arith.addf %32, %35 : vector<8x96xf32>
    %37 = vector.extract_strided_slice %36 {offsets = [0, 0], sizes = [8, 8], strides = [1, 1]} : vector<8x96xf32> to vector<8x8xf32>
    %38 = vector.extract_strided_slice %36 {offsets = [0, 8], sizes = [8, 8], strides = [1, 1]} : vector<8x96xf32> to vector<8x8xf32>
    %39 = vector.extract_strided_slice %36 {offsets = [0, 16], sizes = [8, 8], strides = [1, 1]} : vector<8x96xf32> to vector<8x8xf32>
    %40 = vector.extract_strided_slice %36 {offsets = [0, 24], sizes = [8, 8], strides = [1, 1]} : vector<8x96xf32> to vector<8x8xf32>
    %41 = vector.shape_cast %37 : vector<8x8xf32> to vector<1x8x8xf32>
    %42 = vector.shape_cast %38 : vector<8x8xf32> to vector<1x8x8xf32>
    %43 = vector.shape_cast %39 : vector<8x8xf32> to vector<1x8x8xf32>
    %44 = vector.shape_cast %40 : vector<8x8xf32> to vector<1x8x8xf32>
    %45 = tpu.concatenate %41, %42, %43, %44 in 0 : vector<1x8x8xf32>, vector<1x8x8xf32>, vector<1x8x8xf32>, vector<1x8x8xf32> -> vector<4x8x8xf32>
    %46 = arith.truncf %45 : vector<4x8x8xf32> to vector<4x8x8xbf16>
    %47 = vector.extract_strided_slice %36 {offsets = [0, 32], sizes = [8, 8], strides = [1, 1]} : vector<8x96xf32> to vector<8x8xf32>
    %48 = vector.extract_strided_slice %36 {offsets = [0, 40], sizes = [8, 8], strides = [1, 1]} : vector<8x96xf32> to vector<8x8xf32>
    %49 = vector.extract_strided_slice %36 {offsets = [0, 48], sizes = [8, 8], strides = [1, 1]} : vector<8x96xf32> to vector<8x8xf32>
    %50 = vector.extract_strided_slice %36 {offsets = [0, 56], sizes = [8, 8], strides = [1, 1]} : vector<8x96xf32> to vector<8x8xf32>
    %51 = vector.shape_cast %47 : vector<8x8xf32> to vector<1x8x8xf32>
    %52 = vector.shape_cast %48 : vector<8x8xf32> to vector<1x8x8xf32>
    %53 = vector.shape_cast %49 : vector<8x8xf32> to vector<1x8x8xf32>
    %54 = vector.shape_cast %50 : vector<8x8xf32> to vector<1x8x8xf32>
    %55 = tpu.concatenate %51, %52, %53, %54 in 0 : vector<1x8x8xf32>, vector<1x8x8xf32>, vector<1x8x8xf32>, vector<1x8x8xf32> -> vector<4x8x8xf32>
    %56 = arith.truncf %55 : vector<4x8x8xf32> to vector<4x8x8xbf16>
    %57 = vector.extract_strided_slice %36 {offsets = [0, 64], sizes = [8, 8], strides = [1, 1]} : vector<8x96xf32> to vector<8x8xf32>
    %58 = vector.extract_strided_slice %36 {offsets = [0, 72], sizes = [8, 8], strides = [1, 1]} : vector<8x96xf32> to vector<8x8xf32>
    %59 = vector.extract_strided_slice %36 {offsets = [0, 80], sizes = [8, 8], strides = [1, 1]} : vector<8x96xf32> to vector<8x8xf32>
    %60 = vector.extract_strided_slice %36 {offsets = [0, 88], sizes = [8, 8], strides = [1, 1]} : vector<8x96xf32> to vector<8x8xf32>
    %61 = vector.shape_cast %57 : vector<8x8xf32> to vector<1x8x8xf32>
    %62 = vector.shape_cast %58 : vector<8x8xf32> to vector<1x8x8xf32>
    %63 = vector.shape_cast %59 : vector<8x8xf32> to vector<1x8x8xf32>
    %64 = vector.shape_cast %60 : vector<8x8xf32> to vector<1x8x8xf32>
    %65 = tpu.concatenate %61, %62, %63, %64 in 0 : vector<1x8x8xf32>, vector<1x8x8xf32>, vector<1x8x8xf32>, vector<1x8x8xf32> -> vector<4x8x8xf32>
    %66 = arith.truncf %65 : vector<4x8x8xf32> to vector<4x8x8xbf16>
    "tpu.trace_start"() <{level = 10 : i32, message = "hqd,hkd->hqk"}> : () -> ()
    %cst_19 = arith.constant dense<0.000000e+00> : vector<4x8x8xf32>
    %67 = tpu.matmul %46, %56, %cst_19 {dimension_numbers = #tpu.dot_dimension_numbers<[2], [2], [1], [1], [0, 0, 0, 1, 1, 1], [0], [0]>} : vector<4x8x8xbf16>, vector<4x8x8xbf16>, vector<4x8x8xf32> -> vector<4x8x8xf32>
    "tpu.trace_stop"() : () -> ()
    %c0_20 = arith.constant 0 : index
    %c0_21 = arith.constant 0 : index
    %c0_22 = arith.constant 0 : index
    %68 = vector.load %arg3[%c0_20, %c0_21, %c0_22] : memref<1x1x8xf32, #tpu.memory_space<vmem>>, vector<1x1x8xf32>
    %69 = vector.shape_cast %68 : vector<1x1x8xf32> to vector<1x8xf32>
    %cst_23 = arith.constant 0.000000e+00 : f32
    %70 = vector.broadcast %cst_23 : f32 to vector<1x8xf32>
    %71 = arith.cmpf one, %69, %70 : vector<1x8xf32>
    %72 = vector.shape_cast %71 : vector<1x8xi1> to vector<1x1x8xi1>
    %cst_24 = arith.constant -1.000000e+09 : f32
    %73 = vector.shape_cast %72 : vector<1x1x8xi1> to vector<1x1x8xi1>
    %74 = vector.broadcast %73 : vector<1x1x8xi1> to vector<4x8x8xi1>
    %75 = vector.broadcast %cst_24 : f32 to vector<4x8x8xf32>
    %76 = arith.select %74, %67, %75 : vector<4x8x8xi1>, vector<4x8x8xf32>
    %cst_25 = arith.constant dense<0xFF800000> : vector<4x8xf32>
    %77 = vector.multi_reduction <maximumf>, %76, %cst_25 [2] : vector<4x8x8xf32> to vector<4x8xf32>
    %78 = vector.shape_cast %77 : vector<4x8xf32> to vector<4x8x1xf32>
    %79 = vector.broadcast %78 : vector<4x8x1xf32> to vector<4x8x8xf32>
    %80 = arith.subf %76, %79 : vector<4x8x8xf32>
    %81 = math.exp %80 : vector<4x8x8xf32>
    %cst_26 = arith.constant dense<0.000000e+00> : vector<4x8xf32>
    %82 = vector.multi_reduction <add>, %81, %cst_26 [2] : vector<4x8x8xf32> to vector<4x8xf32>
    %83 = vector.shape_cast %82 : vector<4x8xf32> to vector<4x8x1xf32>
    %84 = vector.broadcast %83 : vector<4x8x1xf32> to vector<4x8x8xf32>
    %85 = arith.divf %81, %84 : vector<4x8x8xf32>
    %86 = arith.truncf %85 : vector<4x8x8xf32> to vector<4x8x8xbf16>
    "tpu.trace_start"() <{level = 10 : i32, message = "hqk,hkd->hqd"}> : () -> ()
    %cst_27 = arith.constant dense<0.000000e+00> : vector<4x8x8xf32>
    %87 = tpu.matmul %86, %66, %cst_27 {dimension_numbers = #tpu.dot_dimension_numbers<[2], [1], [1], [2], [0, 0, 0, 1, 1, 2], [0], [0]>} : vector<4x8x8xbf16>, vector<4x8x8xbf16>, vector<4x8x8xf32> -> vector<4x8x8xf32>
    "tpu.trace_stop"() : () -> ()
    %88 = vector.extract_strided_slice %87 {offsets = [0, 0, 0], sizes = [1, 8, 8], strides = [1, 1, 1]} : vector<4x8x8xf32> to vector<1x8x8xf32>
    %89 = vector.shape_cast %88 : vector<1x8x8xf32> to vector<8x8xf32>
    %90 = vector.extract_strided_slice %87 {offsets = [1, 0, 0], sizes = [1, 8, 8], strides = [1, 1, 1]} : vector<4x8x8xf32> to vector<1x8x8xf32>
    %91 = vector.shape_cast %90 : vector<1x8x8xf32> to vector<8x8xf32>
    %92 = vector.extract_strided_slice %87 {offsets = [2, 0, 0], sizes = [1, 8, 8], strides = [1, 1, 1]} : vector<4x8x8xf32> to vector<1x8x8xf32>
    %93 = vector.shape_cast %92 : vector<1x8x8xf32> to vector<8x8xf32>
    %94 = vector.extract_strided_slice %87 {offsets = [3, 0, 0], sizes = [1, 8, 8], strides = [1, 1, 1]} : vector<4x8x8xf32> to vector<1x8x8xf32>
    %95 = vector.shape_cast %94 : vector<1x8x8xf32> to vector<8x8xf32>
    %96 = tpu.concatenate %89, %91, %93, %95 in 1 : vector<8x8xf32>, vector<8x8xf32>, vector<8x8xf32>, vector<8x8xf32> -> vector<8x32xf32>
    %c0_28 = arith.constant 0 : index
    %c0_29 = arith.constant 0 : index
    %c0_30 = arith.constant 0 : index
    %97 = vector.load %arg8[%c0_28, %c0_29, %c0_30] : memref<1x32x32xbf16, #tpu.memory_space<vmem>>, vector<1x32x32xbf16>
    %98 = vector.shape_cast %97 : vector<1x32x32xbf16> to vector<32x32xbf16>
    %99 = arith.truncf %96 : vector<8x32xf32> to vector<8x32xbf16>
    %cst_31 = arith.constant dense<0.000000e+00> : vector<8x32xf32>
    %100 = tpu.matmul %99, %98, %cst_31 {dimension_numbers = #tpu.dot_dimension_numbers<[1], [0], [0], [1], [0, 0, 1, 1], [], []>} : vector<8x32xbf16>, vector<32x32xbf16>, vector<8x32xf32> -> vector<8x32xf32>
    %c0_32 = arith.constant 0 : index
    %c0_33 = arith.constant 0 : index
    %c0_34 = arith.constant 0 : index
    %101 = vector.load %arg9[%c0_32, %c0_33, %c0_34] : memref<1x1x32xf32, #tpu.memory_space<vmem>>, vector<1x1x32xf32>
    %102 = vector.shape_cast %101 : vector<1x1x32xf32> to vector<1x32xf32>
    %103 = vector.broadcast %102 : vector<1x32xf32> to vector<8x32xf32>
    %104 = arith.addf %100, %103 : vector<8x32xf32>
    %105 = arith.addf %104, %3 : vector<8x32xf32>
    %c0_35 = arith.constant 0 : index
    %c0_36 = arith.constant 0 : index
    %c0_37 = arith.constant 0 : index
    %106 = vector.load %arg10[%c0_35, %c0_36, %c0_37] : memref<1x1x32xf32, #tpu.memory_space<vmem>>, vector<1x1x32xf32>
    %107 = vector.shape_cast %106 : vector<1x1x32xf32> to vector<1x32xf32>
    %c0_38 = arith.constant 0 : index
    %c0_39 = arith.constant 0 : index
    %c0_40 = arith.constant 0 : index
    %108 = vector.load %arg11[%c0_38, %c0_39, %c0_40] : memref<1x1x32xf32, #tpu.memory_space<vmem>>, vector<1x1x32xf32>
    %109 = vector.shape_cast %108 : vector<1x1x32xf32> to vector<1x32xf32>
    %cst_41 = arith.constant dense<0.000000e+00> : vector<8xf32>
    %110 = vector.multi_reduction <add>, %105, %cst_41 [1] : vector<8x32xf32> to vector<8xf32>
    %111 = vector.shape_cast %110 : vector<8xf32> to vector<8x1xf32>
    %cst_42 = arith.constant 3.200000e+01 : f32
    %112 = vector.broadcast %cst_42 : f32 to vector<8x1xf32>
    %113 = arith.divf %111, %112 : vector<8x1xf32>
    %114 = vector.broadcast %113 : vector<8x1xf32> to vector<8x32xf32>
    %115 = arith.subf %105, %114 : vector<8x32xf32>
    %116 = arith.mulf %115, %115 : vector<8x32xf32>
    %cst_43 = arith.constant dense<0.000000e+00> : vector<8xf32>
    %117 = vector.multi_reduction <add>, %116, %cst_43 [1] : vector<8x32xf32> to vector<8xf32>
    %118 = vector.shape_cast %117 : vector<8xf32> to vector<8x1xf32>
    %cst_44 = arith.constant 0.0322580636 : f32
    %119 = vector.broadcast %cst_44 : f32 to vector<8x1xf32>
    %120 = arith.mulf %118, %119 : vector<8x1xf32>
    %121 = math.sqrt %120 : vector<8x1xf32>
    %cst_45 = arith.constant 9.99999997E-7 : f32
    %122 = vector.broadcast %cst_45 : f32 to vector<8x1xf32>
    %123 = arith.addf %121, %122 : vector<8x1xf32>
    %124 = tpu.reciprocal %123 {approx = true} : vector<8x1xf32> -> vector<8x1xf32>
    %125 = vector.broadcast %124 : vector<8x1xf32> to vector<8x32xf32>
    %126 = arith.mulf %115, %125 : vector<8x32xf32>
    %127 = vector.broadcast %107 : vector<1x32xf32> to vector<8x32xf32>
    %128 = arith.mulf %127, %126 : vector<8x32xf32>
    %129 = vector.broadcast %109 : vector<1x32xf32> to vector<8x32xf32>
    %130 = arith.addf %128, %129 : vector<8x32xf32>
    %c0_46 = arith.constant 0 : index
    %c0_47 = arith.constant 0 : index
    %c0_48 = arith.constant 0 : index
    %131 = vector.load %arg12[%c0_46, %c0_47, %c0_48] : memref<1x32x64xbf16, #tpu.memory_space<vmem>>, vector<1x32x64xbf16>
    %132 = vector.shape_cast %131 : vector<1x32x64xbf16> to vector<32x64xbf16>
    %133 = arith.truncf %130 : vector<8x32xf32> to vector<8x32xbf16>
    %cst_49 = arith.constant dense<0.000000e+00> : vector<8x64xf32>
    %134 = tpu.matmul %133, %132, %cst_49 {dimension_numbers = #tpu.dot_dimension_numbers<[1], [0], [0], [1], [0, 0, 1, 1], [], []>} : vector<8x32xbf16>, vector<32x64xbf16>, vector<8x64xf32> -> vector<8x64xf32>
    %c0_50 = arith.constant 0 : index
    %c0_51 = arith.constant 0 : index
    %c0_52 = arith.constant 0 : index
    %135 = vector.load %arg13[%c0_50, %c0_51, %c0_52] : memref<1x1x64xf32, #tpu.memory_space<vmem>>, vector<1x1x64xf32>
    %136 = vector.shape_cast %135 : vector<1x1x64xf32> to vector<1x64xf32>
    %137 = vector.broadcast %136 : vector<1x64xf32> to vector<8x64xf32>
    %138 = arith.addf %134, %137 : vector<8x64xf32>
    %cst_53 = arith.constant 0.000000e+00 : f32
    %139 = vector.broadcast %cst_53 : f32 to vector<8x64xf32>
    %140 = arith.maximumf %138, %139 : vector<8x64xf32>
    %c0_54 = arith.constant 0 : index
    %c0_55 = arith.constant 0 : index
    %c0_56 = arith.constant 0 : index
    %141 = vector.load %arg14[%c0_54, %c0_55, %c0_56] : memref<1x64x32xbf16, #tpu.memory_space<vmem>>, vector<1x64x32xbf16>
    %142 = vector.shape_cast %141 : vector<1x64x32xbf16> to vector<64x32xbf16>
    %143 = arith.truncf %140 : vector<8x64xf32> to vector<8x64xbf16>
    %cst_57 = arith.constant dense<0.000000e+00> : vector<8x32xf32>
    %144 = tpu.matmul %143, %142, %cst_57 {dimension_numbers = #tpu.dot_dimension_numbers<[1], [0], [0], [1], [0, 0, 1, 1], [], []>} : vector<8x64xbf16>, vector<64x32xbf16>, vector<8x32xf32> -> vector<8x32xf32>
    %c0_58 = arith.constant 0 : index
    %c0_59 = arith.constant 0 : index
    %c0_60 = arith.constant 0 : index
    %145 = vector.load %arg15[%c0_58, %c0_59, %c0_60] : memref<1x1x32xf32, #tpu.memory_space<vmem>>, vector<1x1x32xf32>
    %146 = vector.shape_cast %145 : vector<1x1x32xf32> to vector<1x32xf32>
    %147 = vector.broadcast %146 : vector<1x32xf32> to vector<8x32xf32>
    %148 = arith.addf %144, %147 : vector<8x32xf32>
    %149 = arith.addf %148, %105 : vector<8x32xf32>
    %c0_61 = arith.constant 0 : index
    %c0_62 = arith.constant 0 : index
    %150 = vector.load %arg18[%c0_61, %c0_62] : memref<8x32xf32, #tpu.memory_space<vmem>>, vector<8x32xf32>
    tpu.vector_store %arg18[%c0_61, %c0_62], %149 {strides = array<i32>} : memref<8x32xf32, #tpu.memory_space<vmem>>, vector<8x32xf32>,
    %c1_i32 = arith.constant 1 : i32
    %151 = arith.cmpi eq, %arg1, %c1_i32 : i32
    %152 = arith.extui %151 : i1 to i32
    %c0_i32_63 = arith.constant 0 : i32
    %153 = arith.cmpi ne, %152, %c0_i32_63 : i32
    scf.if %153 {
      %c0_64 = arith.constant 0 : index
      %c0_65 = arith.constant 0 : index
      %c0_66 = arith.constant 0 : index
      %154 = vector.load %arg16[%c0_64, %c0_65, %c0_66] : memref<1x8x32xf32, #tpu.memory_space<vmem>>, vector<1x8x32xf32>
      %155 = vector.shape_cast %154 : vector<1x8x32xf32> to vector<8x32xf32>
      %156 = vector.shape_cast %149 : vector<8x32xf32> to vector<1x8x32xf32>
      tpu.vector_store %arg16[%c0_64, %c0_65, %c0_66], %156 {strides = array<i32>} : memref<1x8x32xf32, #tpu.memory_space<vmem>>, vector<1x8x32xf32>,
      %c0_67 = arith.constant 0 : index
      %c0_68 = arith.constant 0 : index
      %c0_69 = arith.constant 0 : index
      %c0_70 = arith.constant 0 : index
      %157 = vector.load %arg17[%c0_67, %c0_68, %c0_69, %c0_70] : memref<1x4x8x8xf32, #tpu.memory_space<vmem>>, vector<1x4x8x8xf32>
      %158 = vector.shape_cast %157 : vector<1x4x8x8xf32> to vector<4x8x8xf32>
      %159 = vector.shape_cast %85 : vector<4x8x8xf32> to vector<1x4x8x8xf32>
      tpu.vector_store %arg17[%c0_67, %c0_68, %c0_69, %c0_70], %159 {strides = array<i32>} : memref<1x4x8x8xf32, #tpu.memory_space<vmem>>, vector<1x4x8x8xf32>,
    } else {
    }
    return
  }
  func.func @transform_0(%arg0: i32, %arg1: i32) -> (i32, i32, i32) {
    %c0_i32 = arith.constant 0 : i32
    %c0_i32_0 = arith.constant 0 : i32
    %c0_i32_1 = arith.constant 0 : i32
    return %arg0, %c0_i32, %c0_i32_0 : i32, i32, i32
  }
  func.func @transform_1(%arg0: i32, %arg1: i32) -> (i32, i32, i32) {
    %c0_i32 = arith.constant 0 : i32
    %c0_i32_0 = arith.constant 0 : i32
    %c0_i32_1 = arith.constant 0 : i32
    return %arg0, %c0_i32, %c0_i32_0 : i32, i32, i32
  }
  func.func @transform_2(%arg0: i32, %arg1: i32) -> (i32, i32, i32) {
    %c0_i32 = arith.constant 0 : i32
    %c0_i32_0 = arith.constant 0 : i32
    %c0_i32_1 = arith.constant 0 : i32
    return %arg1, %c0_i32, %c0_i32_0 : i32, i32, i32
  }
  func.func @transform_3(%arg0: i32, %arg1: i32) -> (i32, i32, i32) {
    %c0_i32 = arith.constant 0 : i32
    %c0_i32_0 = arith.constant 0 : i32
    %c0_i32_1 = arith.constant 0 : i32
    return %arg1, %c0_i32, %c0_i32_0 : i32, i32, i32
  }
  func.func @transform_4(%arg0: i32, %arg1: i32) -> (i32, i32, i32) {
    %c0_i32 = arith.constant 0 : i32
    %c0_i32_0 = arith.constant 0 : i32
    %c0_i32_1 = arith.constant 0 : i32
    return %arg1, %c0_i32, %c0_i32_0 : i32, i32, i32
  }
  func.func @transform_5(%arg0: i32, %arg1: i32) -> (i32, i32, i32) {
    %c0_i32 = arith.constant 0 : i32
    %c0_i32_0 = arith.constant 0 : i32
    %c0_i32_1 = arith.constant 0 : i32
    return %arg1, %c0_i32, %c0_i32_0 : i32, i32, i32
  }
  func.func @transform_6(%arg0: i32, %arg1: i32) -> (i32, i32, i32) {
    %c0_i32 = arith.constant 0 : i32
    %c0_i32_0 = arith.constant 0 : i32
    %c0_i32_1 = arith.constant 0 : i32
    return %arg1, %c0_i32, %c0_i32_0 : i32, i32, i32
  }
  func.func @transform_7(%arg0: i32, %arg1: i32) -> (i32, i32, i32) {
    %c0_i32 = arith.constant 0 : i32
    %c0_i32_0 = arith.constant 0 : i32
    %c0_i32_1 = arith.constant 0 : i32
    return %arg1, %c0_i32, %c0_i32_0 : i32, i32, i32
  }
  func.func @transform_8(%arg0: i32, %arg1: i32) -> (i32, i32, i32) {
    %c0_i32 = arith.constant 0 : i32
    %c0_i32_0 = arith.constant 0 : i32
    %c0_i32_1 = arith.constant 0 : i32
    return %arg1, %c0_i32, %c0_i32_0 : i32, i32, i32
  }
  func.func @transform_9(%arg0: i32, %arg1: i32) -> (i32, i32, i32) {
    %c0_i32 = arith.constant 0 : i32
    %c0_i32_0 = arith.constant 0 : i32
    %c0_i32_1 = arith.constant 0 : i32
    return %arg1, %c0_i32, %c0_i32_0 : i32, i32, i32
  }
  func.func @transform_10(%arg0: i32, %arg1: i32) -> (i32, i32, i32) {
    %c0_i32 = arith.constant 0 : i32
    %c0_i32_0 = arith.constant 0 : i32
    %c0_i32_1 = arith.constant 0 : i32
    return %arg1, %c0_i32, %c0_i32_0 : i32, i32, i32
  }
  func.func @transform_11(%arg0: i32, %arg1: i32) -> (i32, i32, i32) {
    %c0_i32 = arith.constant 0 : i32
    %c0_i32_0 = arith.constant 0 : i32
    %c0_i32_1 = arith.constant 0 : i32
    return %arg1, %c0_i32, %c0_i32_0 : i32, i32, i32
  }
  func.func @transform_12(%arg0: i32, %arg1: i32) -> (i32, i32, i32) {
    %c0_i32 = arith.constant 0 : i32
    %c0_i32_0 = arith.constant 0 : i32
    %c0_i32_1 = arith.constant 0 : i32
    return %arg1, %c0_i32, %c0_i32_0 : i32, i32, i32
  }
  func.func @transform_13(%arg0: i32, %arg1: i32) -> (i32, i32, i32) {
    %c0_i32 = arith.constant 0 : i32
    %c0_i32_0 = arith.constant 0 : i32
    %c0_i32_1 = arith.constant 0 : i32
    return %arg1, %c0_i32, %c0_i32_0 : i32, i32, i32
  }
  func.func @transform_14(%arg0: i32, %arg1: i32) -> (i32, i32, i32) {
    %c0_i32 = arith.constant 0 : i32
    %c0_i32_0 = arith.constant 0 : i32
    %c0_i32_1 = arith.constant 0 : i32
    return %arg0, %c0_i32, %c0_i32_0 : i32, i32, i32
  }
  func.func @transform_15(%arg0: i32, %arg1: i32) -> (i32, i32, i32, i32) {
    %c0_i32 = arith.constant 0 : i32
    %c0_i32_0 = arith.constant 0 : i32
    %c0_i32_1 = arith.constant 0 : i32
    %c0_i32_2 = arith.constant 0 : i32
    return %arg0, %c0_i32, %c0_i32_0, %c0_i32_1 : i32, i32, i32, i32
  }
}

</mosaic_0001>

<llo_original>
// kernel: _lambda_.2
$region0: #{_lambda_.2}
  #allocation0 [shape = 'u32[]', space=smem, size = 0x4, offset = 0x4, fixed_abs, tag = 'smem constant byte address 0x4 - core index']
  #allocation1 [shape = 'u32[72,128]{1,0:T(1,128)}', space=vmem, size = 0x9000, scoped, tag = 'internal scratch']
  #allocation2 [shape = 'f32[16,96]{1,0:T(8,128)}', space=vmem, size = 0x2000, scoped, tag = 'scratch operand']
  #allocation3 [shape = 'f32[16,16]{1,0:T(8,128)}', space=vmem, size = 0x2000, scoped, tag = 'scratch operand']
  #allocation4 [shape = 'f32[16,16]{1,0:T(8,128)}', space=vmem, size = 0x2000, scoped, tag = 'scratch operand']
  %s0 = inlined_call_operand.hbm [shape: f32[2,8,16], index: 0, kind: input, shape index: {}]
  %s1 = inlined_call_operand.hbm [shape: bf16[16,96], index: 1, kind: input, shape index: {}]
  %s2 = inlined_call_operand.vmem [shape: f32[1,96], index: 2, kind: input, shape index: {}]
  %s3 = inlined_call_operand.hbm [shape: f32[16,48], index: 3, kind: input, shape index: {}]
  %s4 = inlined_call_operand.vmem [shape: f32[1,48], index: 4, kind: input, shape index: {}]
  %s5 = inlined_call_operand.hbm [shape: f32[16,48], index: 5, kind: input, shape index: {}]
  %s6 = inlined_call_operand.vmem [shape: f32[1,48], index: 6, kind: input, shape index: {}]
  %s7 = inlined_call_operand.vmem [shape: f32[2,8,32], index: 7, kind: output, shape index: {}]
  %s8 = sld [smem:[#allocation0]]
  $region61: #{_lambda_.2} parent=0
    _
  %s10 = ssub.s32 1, %s8
  %s11 = scalar_select 0, %s10, %s8
  $region1: #{_lambda_.2} parent=0
    #allocation5 [shape = 'u8[8192]{0}', space=vmem, size = 0x2000, scoped, tag = 'input window, operand 0, single buffered']
    #allocation6 [shape = 's32[1]{0}', space=sflag, size = 0x4, scoped, tag = 'scoped memory for _lambda_.2']
    #allocation7 [shape = 'u8[4096]{0}', space=vmem, size = 0x1000, scoped, tag = 'input window, operand 1, single buffered']
    #allocation8 [shape = 's32[1]{0}', space=sflag, size = 0x4, scoped, tag = 'scoped memory for _lambda_.2']
    #allocation9 [shape = 'u8[8192]{0}', space=vmem, size = 0x2000, scoped, tag = 'input window, operand 3, single buffered']
    #allocation10 [shape = 'u8[8192]{0}', space=vmem, size = 0x2000, scoped, tag = 'input window, operand 5, single buffered']
    #allocation11 [shape = 's32[1]{0}', space=sflag, size = 0x4, scoped, tag = 'scoped memory for _lambda_.2']
    %12 = vsyncpa [#allocation6], 0
    %13 = vsyncpa [#allocation8], 0
    %14 = vsyncpa [#allocation11], 0
    // Predicated region
    $region2: #{_lambda_.2} parent=1 // pred_check
      _
    $region3: #{_lambda_.2} parent=1 // pred_check_branch
      %16 = sbr.rel (0) target = $region5
    $region4: #{_lambda_.2} parent=1 // pred_region
      %18 = vsyncadd [#allocation6], 0
      %s19 = sshll.u32 %s0, 4
      %s20 = int_to_ptr.hbm [resolvable:$true] %s19
      %s21 = sshll.u32 [#allocation5], 4
      %s22 = int_to_ptr.vmem [resolvable:$true] %s21
      %27 = dma.hbm_to_vmem [thread:$0]  %s20, 256, %s22, [#allocation6], 128, 128, 8
    $region5: #{_lambda_.2} parent=1 // pred_fallthru
      _
    // Predicated region
    $region6: #{_lambda_.2} parent=1 // pred_check
      _
    $region7: #{_lambda_.2} parent=1 // pred_check_branch
      %29 = sbr.rel (0) target = $region9
    $region8: #{_lambda_.2} parent=1 // pred_region
      %31 = vsyncadd [#allocation8], 0
      %s32 = sshll.u32 %s1, 4
      %s33 = int_to_ptr.hbm [resolvable:$true] %s32
      %s34 = sshll.u32 [#allocation7], 4
      %s35 = int_to_ptr.vmem [resolvable:$true] %s34
      %40 = dma.hbm_to_vmem [thread:$0]  %s33, 128, %s35, [#allocation8], 64, 64, 4
    $region9: #{_lambda_.2} parent=1 // pred_fallthru
      _
    // Predicated region
    $region10: #{_lambda_.2} parent=1 // pred_check
      _
    $region11: #{_lambda_.2} parent=1 // pred_check_branch
      %42 = sbr.rel (0) target = $region13
    $region12: #{_lambda_.2} parent=1 // pred_region
      _
    $region13: #{_lambda_.2} parent=1 // pred_fallthru
      _
    // Predicated region
    $region14: #{_lambda_.2} parent=1 // pred_check
      _
    $region15: #{_lambda_.2} parent=1 // pred_check_branch
      %44 = sbr.rel (0) target = $region17
    $region16: #{_lambda_.2} parent=1 // pred_region
      %46 = vsyncadd [#allocation8], 0
      %s47 = sshll.u32 %s3, 4
      %s48 = int_to_ptr.hbm [resolvable:$true] %s47
      %s49 = sshll.u32 [#allocation9], 4
      %s50 = int_to_ptr.vmem [resolvable:$true] %s49
      %55 = dma.hbm_to_vmem [thread:$0]  %s48, 256, %s50, [#allocation8], 128, 128, 8
    $region17: #{_lambda_.2} parent=1 // pred_fallthru
      _
    // Predicated region
    $region18: #{_lambda_.2} parent=1 // pred_check
      _
    $region19: #{_lambda_.2} parent=1 // pred_check_branch
      %57 = sbr.rel (0) target = $region21
    $region20: #{_lambda_.2} parent=1 // pred_region
      _
    $region21: #{_lambda_.2} parent=1 // pred_fallthru
      _
    // Predicated region
    $region22: #{_lambda_.2} parent=1 // pred_check
      _
    $region23: #{_lambda_.2} parent=1 // pred_check_branch
      %59 = sbr.rel (0) target = $region25
    $region24: #{_lambda_.2} parent=1 // pred_region
      %61 = vsyncadd [#allocation11], 0
      %s62 = sshll.u32 %s5, 4
      %s63 = int_to_ptr.hbm [resolvable:$true] %s62
      %s64 = sshll.u32 [#allocation10], 4
      %s65 = int_to_ptr.vmem [resolvable:$true] %s64
      %70 = dma.hbm_to_vmem [thread:$0]  %s63, 256, %s65, [#allocation11], 128, 128, 8
    $region25: #{_lambda_.2} parent=1 // pred_fallthru
      _
    // Predicated region
    $region26: #{_lambda_.2} parent=1 // pred_check
      _
    $region27: #{_lambda_.2} parent=1 // pred_check_branch
      %72 = sbr.rel (0) target = $region29
    $region28: #{_lambda_.2} parent=1 // pred_region
      _
    $region29: #{_lambda_.2} parent=1 // pred_fallthru
      _
    // Predicated region
    $region30: #{_lambda_.2} parent=1 // pred_check
      _
    $region31: #{_lambda_.2} parent=1 // pred_check_branch
      %74 = sbr.rel (0) target = $region33
    $region32: #{_lambda_.2} parent=1 // pred_region
      %76 = dma.done [#allocation6], 256
    $region33: #{_lambda_.2} parent=1 // pred_fallthru
      _
    // Predicated region
    $region34: #{_lambda_.2} parent=1 // pred_check
      _
    $region35: #{_lambda_.2} parent=1 // pred_check_branch
      %78 = sbr.rel (0) target = $region37
    $region36: #{_lambda_.2} parent=1 // pred_region
      %80 = dma.done [#allocation8], 128
    $region37: #{_lambda_.2} parent=1 // pred_fallthru
      _
    // Predicated region
    $region38: #{_lambda_.2} parent=1 // pred_check
      _
    $region39: #{_lambda_.2} parent=1 // pred_check_branch
      %82 = sbr.rel (0) target = $region41
    $region40: #{_lambda_.2} parent=1 // pred_region
      %84 = dma.done [#allocation8], 256
    $region41: #{_lambda_.2} parent=1 // pred_fallthru
      _
    // Predicated region
    $region42: #{_lambda_.2} parent=1 // pred_check
      _
    $region43: #{_lambda_.2} parent=1 // pred_check_branch
      %86 = sbr.rel (0) target = $region45
    $region44: #{_lambda_.2} parent=1 // pred_region
      %88 = dma.done [#allocation11], 256
    $region45: #{_lambda_.2} parent=1 // pred_fallthru
      _
    %v90 = vld [vmem:[#allocation5] sm:$0xff]
    %v91 = vld [vmem:[#allocation5 + $0x8] sm:$0xff]
    %v92 = vpack.c.bf16 %v91, %v90
    %v93 = vld [vmem:[#allocation7] sm:$0xf]
    %v94 = vld [vmem:[#allocation7 + $0x4] sm:$0xf]
    %v95 = vld [vmem:[%s2] sm:$0x1]
    %v97 = vperm.slane %v95, 0
    %v101 = vunpack.c.l.b16 %v93
    %v102 = vunpack.c.l.b16 %v94
    %v103 = vpack.c.b16 %v102, %v101
    %vm105 = vcmask 130048
    %v107 = vsel %vm105, %v92, 0
    %109 = vmatpush.bf16.msra.mxu0 0
    %110 = vmatpush.bf16.msra.mxu0 0
    %111 = vmatpush.bf16.msra.mxu0 0
    %112 = vmatpush.bf16.msra.mxu0 0
    %113 = vmatpush.bf16.msra.mxu0 0
    %114 = vmatpush.bf16.msra.mxu0 0
    %115 = vmatpush.bf16.msra.mxu0 0
    %116 = vmatpush.bf16.msra.mxu0 %v103
    %117 = vmatmul.bf16.gmra.mxu0 %v107
    %v118 = vpop.f32.mrf.mxu0
    %v119 = vadd.f32 %v97, %v118
    %v120 = vpop.f32.mrf.mxu0
    %v121 = vadd.f32 %v97, %v120
    %122 = vdwg.mxu0
    %vm123 = vcmask 785408
    %124 = vst.msk [vmem:[#allocation2] sm:$0xff] %vm123, %v119
    %125 = vst.msk [vmem:[#allocation2 + $0x8] sm:$0xff] %vm123, %v121
    %v126 = vld [vmem:[#allocation9] sm:$0xff]
    %v127 = vld [vmem:[#allocation9 + $0x8] sm:$0xff]
    %v128 = vld [vmem:[%s4] sm:$0x1]
    %v129 = vld [vmem:[#allocation10] sm:$0xff]
    %v130 = vld [vmem:[#allocation10 + $0x8] sm:$0xff]
    %v131 = vld [vmem:[%s6] sm:$0x1]
    loop: start=0, step=1, limit=8
    $region46: #{_lambda_.2} parent=1 // loop_pre_header
      _
    $region47: #{_lambda_.2} parent=1 // loop_header
      %s133 = sphi 0, %s137
      %p134 = scmp.ge.s32.totalorder %s133, 8
      %v138 = vphi 0.0, %v217
      %v139 = vphi 0.0, %v296
    $region48: #{_lambda_.2} parent=1 // loop_header_branch
      %136 = sbr.rel (%p134) target = $region52
    $region49: #{_lambda_.2} parent=1 // loop_body
      %s140 = ssub.s32 7, %s133
      %v142 = vperm.slane %v128, 0
      %145 = vrot.lane.b32.xlu0 %v138, 112
      %v146 = vpop.permute.xlu0 %145
      %v147 = vsel %vm105, %v146, 0
      %149 = vmatpush.msra.mxu0 0.0
      %150 = vmatpush.msra.mxu0 0.0
      %151 = vmatpush.msra.mxu0 0.0
      %152 = vmatpush.msra.mxu0 0.0
      %153 = vmatpush.msra.mxu0 0.0
      %154 = vmatpush.msra.mxu0 0.0
      %155 = vmatpush.msra.mxu0 0.0
      %156 = vmatpush.msra.mxu0 0.0
      %157 = vmatpush.msra.mxu0 0.0
      %158 = vmatpush.msra.mxu0 0.0
      %159 = vmatpush.msra.mxu0 0.0
      %160 = vmatpush.msra.mxu0 0.0
      %161 = vmatpush.msra.mxu0 0.0
      %162 = vmatpush.msra.mxu0 0.0
      %163 = vmatpush.msra.mxu0 %v127
      %164 = vmatpush.msra.mxu0 %v126
      %165 = vmatmul.f32.gmra.mxu0 %v147
      %v166 = vpop.f32.mrf.mxu0
      %v167 = vadd.f32 %v142, %v166
      %168 = vdwg.mxu0
      %s169 = scalar_lea.vmem [#allocation2], %s133
      %v170 = vld [vmem:[%s169] sm:$0x1]
      %s171 = sadd.s32 %s133, 8
      %s172 = scalar_lea.vmem [#allocation2], %s171
      %v173 = vld [vmem:[%s172] sm:$0x1]
      %v175 = vrot.slane %v173, 7
      %vm177 = vcmask 1040384
      %v178 = vsel %vm177, %v170, %v175
      %v179 = vadd.f32 %v178, %v167
      %v180 = vxor.u32 %v179, 2147483648
      %v181 = vmul.f32 %v180, 1.442695
      %v182 = vpow.pop %v181
      %v183 = vadd.f32 %v182, 1.0
      %v184 = vrcp.pop %v183
      %v185 = vmul.f32 %v183, %v184
      %v186 = vsub.f32 1.0, %v185
      %v187 = vmul.f32 %v184, %v186
      %v188 = vadd.f32 %v184, %v187
      %vm189 = vweird.f32 %v183
      %vm190 = vweird.f32 %v184
      %vm191 = vmor %vm189, %vm190
      %v192 = vsel %vm191, %v184, %v188
      %v193 = vand.u32 2147483647, %v183
      %vm194 = vcmp.eq.f32.partialorder %v193, 8.507059e+37
      %v195 = vand.u32 %v183, 2147483648
      %v196 = vor.u32 1.1754944e-38, %v195
      %v197 = vsel %vm194, %v196, %v192
      %v198 = vmul.f32 1.0, %v197
      %200 = vrot.lane.b32.xlu0 %v167, 96
      %v201 = vpop.permute.xlu0 %200
      %v203 = vmul.f32 %v198, %v201
      %205 = vrot.lane.b32.xlu0 %v203, 32
      %v206 = vpop.permute.xlu0 %205
      %v208 = vadd.f32 %v178, %v206
      %v209 = vtanh.pop %v208
      %v210 = vsub.f32 1.0, %v198
      %212 = vrot.lane.b32.xlu0 %v209, 112
      %v213 = vpop.permute.xlu0 %212
      %v215 = vmul.f32 %v210, %v213
      %v216 = vmul.f32 %v198, %v138
      %v217 = vadd.f32 %v215, %v216
      %v219 = vperm.slane %v131, 0
      %222 = vrot.lane.b32.xlu0 %v139, 64
      %v223 = vpop.permute.xlu0 %222
      %v224 = vsel %vm105, %v223, 0
      %226 = vmatpush.msra.mxu0 0.0
      %227 = vmatpush.msra.mxu0 0.0
      %228 = vmatpush.msra.mxu0 0.0
      %229 = vmatpush.msra.mxu0 0.0
      %230 = vmatpush.msra.mxu0 0.0
      %231 = vmatpush.msra.mxu0 0.0
      %232 = vmatpush.msra.mxu0 0.0
      %233 = vmatpush.msra.mxu0 0.0
      %234 = vmatpush.msra.mxu0 0.0
      %235 = vmatpush.msra.mxu0 0.0
      %236 = vmatpush.msra.mxu0 0.0
      %237 = vmatpush.msra.mxu0 0.0
      %238 = vmatpush.msra.mxu0 0.0
      %239 = vmatpush.msra.mxu0 0.0
      %240 = vmatpush.msra.mxu0 %v130
      %241 = vmatpush.msra.mxu0 %v129
      %242 = vmatmul.f32.gmra.mxu0 %v224
      %v243 = vpop.f32.mrf.mxu0
      %v244 = vadd.f32 %v219, %v243
      %245 = vdwg.mxu0
      %s246 = scalar_lea.vmem [#allocation2], %s140
      %v247 = vld [vmem:[%s246] sm:$0x1]
      %s248 = ssub.s32 15, %s133
      %s249 = scalar_lea.vmem [#allocation2], %s248
      %v250 = vld [vmem:[%s249] sm:$0x1]
      %v252 = vrot.slane %v250, 7
      %v254 = vsel %vm177, %v247, %v252
      %256 = vrot.lane.b32.xlu0 %v244, 48
      %v257 = vpop.permute.xlu0 %256
      %v259 = vadd.f32 %v254, %v257
      %v260 = vxor.u32 %v259, 2147483648
      %v261 = vmul.f32 %v260, 1.442695
      %v262 = vpow.pop %v261
      %v263 = vadd.f32 %v262, 1.0
      %v264 = vrcp.pop %v263
      %v265 = vmul.f32 %v263, %v264
      %v266 = vsub.f32 1.0, %v265
      %v267 = vmul.f32 %v264, %v266
      %v268 = vadd.f32 %v264, %v267
      %vm269 = vweird.f32 %v263
      %vm270 = vweird.f32 %v264
      %vm271 = vmor %vm269, %vm270
      %v272 = vsel %vm271, %v264, %v268
      %v273 = vand.u32 2147483647, %v263
      %vm274 = vcmp.eq.f32.partialorder %v273, 8.507059e+37
      %v275 = vand.u32 %v263, 2147483648
      %v276 = vor.u32 1.1754944e-38, %v275
      %v277 = vsel %vm274, %v276, %v272
      %v278 = vmul.f32 1.0, %v277
      %279 = vrot.lane.b32.xlu0 %v244, 16
      %v280 = vpop.permute.xlu0 %279
      %v282 = vmul.f32 %v278, %v280
      %284 = vrot.lane.b32.xlu0 %v282, 32
      %v285 = vpop.permute.xlu0 %284
      %v287 = vadd.f32 %v254, %v285
      %v288 = vtanh.pop %v287
      %v289 = vsub.f32 1.0, %v278
      %291 = vrot.lane.b32.xlu0 %v288, 112
      %v292 = vpop.permute.xlu0 %291
      %v294 = vmul.f32 %v289, %v292
      %v295 = vmul.f32 %v278, %v139
      %v296 = vadd.f32 %v294, %v295
      %298 = vrot.lane.b32.xlu0 %v217, 112
      %v299 = vpop.permute.xlu0 %298
      %s301 = scalar_lea.vmem [#allocation3], %s133
      %vm302 = vcmask 122880
      %303 = vst.msk [vmem:[%s301] sm:$0x1] %vm302, %v299
      %305 = vrot.lane.b32.xlu0 %v296, 64
      %v306 = vpop.permute.xlu0 %305
      %s308 = scalar_lea.vmem [#allocation4], %s140
      %309 = vst.msk [vmem:[%s308] sm:$0x1] %vm302, %v306
      %s310 = scalar_lea.vmem [#allocation3], %s171
      %vm311 = vcmask 123905
      %312 = vst.msk [vmem:[%s310 - $0x1] sm:$0x2] %vm311, %v299
      %s313 = scalar_lea.vmem [#allocation4], %s248
      %314 = vst.msk [vmem:[%s313 - $0x1] sm:$0x2] %vm311, %v306
    $region50: #{_lambda_.2} parent=1 // loop_footer
      %s137 = sadd.s32 1, %s133
    $region51: #{_lambda_.2} parent=1 // loop_footer_branch
      %132 = sbr.rel target = $region47
    $region52: #{_lambda_.2} parent=1 // loop_exit
      _
    %v315 = vld [vmem:[#allocation3] sm:$0xff]
    %v316 = vld [vmem:[#allocation3 + $0x8] sm:$0xff]
    %v317 = vld [vmem:[#allocation4] sm:$0xff]
    %v318 = vld [vmem:[#allocation4 + $0x8] sm:$0xff]
    %321 = vrot.lane.b32.xlu0 %v317, 16
    %v322 = vpop.permute.xlu0 %321
    %323 = vrot.lane.b32.xlu0 %v318, 16
    %v324 = vpop.permute.xlu0 %323
    %v327 = vsel %vm105, %v315, %v322
    %v328 = vsel %vm105, %v316, %v324
    %vm329 = vcmask 261120
    %330 = vst.msk [vmem:[%s7] sm:$0xff] %vm329, %v327
    %331 = vst.msk [vmem:[%s7 + $0x8] sm:$0xff] %vm329, %v328
    // Predicated region
    $region53: #{_lambda_.2} parent=1 // pred_check
      _
    $region54: #{_lambda_.2} parent=1 // pred_check_branch
      %333 = sbr.rel (0) target = $region56
    $region55: #{_lambda_.2} parent=1 // pred_region
      _
    $region56: #{_lambda_.2} parent=1 // pred_fallthru
      _
    // Predicated region
    $region57: #{_lambda_.2} parent=1 // pred_check
      _
    $region58: #{_lambda_.2} parent=1 // pred_check_branch
      %335 = sbr.rel (0) target = $region60
    $region59: #{_lambda_.2} parent=1 // pred_region
      _
    $region60: #{_lambda_.2} parent=1 // pred_fallthru
      _
    %336 = vsyncpa [#allocation6], 1
    %337 = vsyncpa [#allocation8], 1
    %338 = vsyncpa [#allocation11], 1

// kernel: _lambda_.3
$region0: #{_lambda_.3}
  #allocation0 [shape = 'u32[]', space=smem, size = 0x4, offset = 0x4, fixed_abs, tag = 'smem constant byte address 0x4 - core index']
  #allocation1 [shape = 'u32[72,128]{1,0:T(1,128)}', space=vmem, size = 0x9000, scoped, tag = 'internal scratch']
  #allocation2 [shape = 'f32[8,32]{1,0:T(8,128)}', space=vmem, size = 0x1000, scoped, tag = 'scratch operand']
  %s0 = inlined_call_operand.vmem [shape: f32[2,8,32], index: 0, kind: input, shape index: {}]
  %s1 = inlined_call_operand.vmem [shape: f32[2,1,8], index: 1, kind: input, shape index: {}]
  %s2 = inlined_call_operand.vmem [shape: f32[2,1,32], index: 2, kind: input, shape index: {}, may-alias: {2,8}]
  %s3 = inlined_call_operand.vmem [shape: f32[2,1,32], index: 3, kind: input, shape index: {}, may-alias: {3,7,9,13}]
  %s4 = inlined_call_operand.hbm [shape: bf16[2,32,96], index: 4, kind: input, shape index: {}]
  %s5 = inlined_call_operand.vmem [shape: f32[2,1,96], index: 5, kind: input, shape index: {}]
  %s6 = inlined_call_operand.hbm [shape: bf16[2,32,32], index: 6, kind: input, shape index: {}]
  %s7 = inlined_call_operand.vmem [shape: f32[2,1,32], index: 7, kind: input, shape index: {}, may-alias: {3,7,9,13}]
  %s8 = inlined_call_operand.vmem [shape: f32[2,1,32], index: 8, kind: input, shape index: {}, may-alias: {2,8}]
  %s9 = inlined_call_operand.vmem [shape: f32[2,1,32], index: 9, kind: input, shape index: {}, may-alias: {3,7,9,13}]
  %s10 = inlined_call_operand.hbm [shape: bf16[2,32,64], index: 10, kind: input, shape index: {}]
  %s11 = inlined_call_operand.vmem [shape: f32[2,1,64], index: 11, kind: input, shape index: {}]
  %s12 = inlined_call_operand.hbm [shape: bf16[2,64,32], index: 12, kind: input, shape index: {}]
  %s13 = inlined_call_operand.vmem [shape: f32[2,1,32], index: 13, kind: input, shape index: {}, may-alias: {3,7,9,13}]
  %s14 = inlined_call_operand.hbm [shape: f32[2,8,32], index: 14, kind: output, shape index: {0}]
  %s15 = inlined_call_operand.hbm [shape: f32[2,4,8,8], index: 15, kind: output, shape index: {1}]
  %16 = xla_tuple %s14, %s15
  %s17 = sld [smem:[#allocation0]]
  $region121: #{_lambda_.3} parent=0
    _
  %s19 = ssub.s32 1, %s17
  %s20 = scalar_select 0, %s19, %s17
  $region1: #{_lambda_.3} parent=0
    #allocation3 [shape = 'u8[16384]{0}', space=vmem, size = 0x4000, scoped, tag = 'input window, operand 4']
    #allocation4 [shape = 's32[2]{0}', space=sflag, size = 0x8, scoped, tag = 'scoped memory for _lambda_.3']
    #allocation5 [shape = 's32[2]{0}', space=sflag, size = 0x8, scoped, tag = 'scoped memory for _lambda_.3']
    #allocation6 [shape = 'u8[16384]{0}', space=vmem, size = 0x4000, scoped, tag = 'input window, operand 6']
    #allocation7 [shape = 's32[2]{0}', space=sflag, size = 0x8, scoped, tag = 'scoped memory for _lambda_.3']
    #allocation8 [shape = 'u8[16384]{0}', space=vmem, size = 0x4000, scoped, tag = 'input window, operand 10']
    #allocation9 [shape = 'u8[32768]{0}', space=vmem, size = 0x8000, scoped, tag = 'input window, operand 12']
    #allocation10 [shape = 's32[2]{0}', space=sflag, size = 0x8, scoped, tag = 'scoped memory for _lambda_.3']
    #allocation11 [shape = 'u8[8192]{0}', space=vmem, size = 0x2000, scoped, tag = 'output window, operand 0']
    #allocation12 [shape = 'u8[32768]{0}', space=vmem, size = 0x8000, scoped, tag = 'output window, operand 1']
    #allocation13 [shape = 's32[2]{0}', space=sflag, size = 0x8, scoped, tag = 'scoped memory for _lambda_.3']
    %21 = vsyncpa [#allocation4], 0
    %s22 = scalar_lea.sflag [#allocation4], 1
    %23 = vsyncpa %s22, 0
    %24 = vsyncpa [#allocation7], 0
    %s25 = scalar_lea.sflag [#allocation7], 1
    %26 = vsyncpa %s25, 0
    %27 = vsyncpa [#allocation10], 0
    %s28 = scalar_lea.sflag [#allocation10], 1
    %29 = vsyncpa %s28, 0
    %30 = vsyncpa [#allocation5], 0
    %s31 = scalar_lea.sflag [#allocation5], 1
    %32 = vsyncpa %s31, 0
    %33 = vsyncpa [#allocation13], 0
    %s34 = scalar_lea.sflag [#allocation13], 1
    %35 = vsyncpa %s34, 0
    loop: start=0, step=1, limit=6
    $region2: #{_lambda_.3} parent=1 // loop_pre_header
      _
    $region3: #{_lambda_.3} parent=1 // loop_header
      %s37 = sphi 0, %s41
      %p38 = scmp.ge.s32.totalorder %s37, 6
      %s44 = sphi 0, %s56
      %s45 = sphi 0, %s52
      %s46 = sphi 0, %s44
      %s47 = sphi 0, %s45
      %s48 = sphi 0, %s46
      %s49 = sphi 0, %s47
      %s59 = sphi 0, %s61
      %s62 = sphi 0, %s59
      %s63 = sphi 0, %s62
      %s79 = sphi 0, %s63
      %s85 = sphi 0, %s87
      %s88 = sphi 0, %s85
      %s89 = sphi 0, %s88
      %s105 = sphi 0, %s89
      %s111 = sphi 0, %s113
      %s114 = sphi 0, %s111
      %s115 = sphi 0, %s114
      %s131 = sphi 0, %s115
      %s137 = sphi 0, %s139
      %s140 = sphi 0, %s137
      %s141 = sphi 0, %s140
      %s157 = sphi 0, %s141
      %s163 = sphi 0, %s165
      %s166 = sphi 0, %s163
      %s167 = sphi 0, %s166
      %s183 = sphi 0, %s167
      %s189 = sphi 0, %s191
      %s192 = sphi 0, %s189
      %s193 = sphi 0, %s192
      %s209 = sphi 0, %s193
      %s215 = sphi 0, %s217
      %s218 = sphi 0, %s215
      %s219 = sphi 0, %s218
      %s235 = sphi 0, %s219
      %s241 = sphi 0, %s243
      %s244 = sphi 0, %s241
      %s245 = sphi 0, %s244
      %s261 = sphi 0, %s245
      %s267 = sphi 0, %s269
      %s270 = sphi 0, %s267
      %s271 = sphi 0, %s270
      %s287 = sphi 0, %s271
      %s293 = sphi 0, %s295
      %s296 = sphi 0, %s293
      %s297 = sphi 0, %s296
      %s313 = sphi 0, %s297
      %s319 = sphi 0, %s321
      %s322 = sphi 0, %s319
      %s323 = sphi 0, %s322
      %s339 = sphi 0, %s323
      %s345 = sphi 0, %s347
      %s348 = sphi 0, %s345
      %s349 = sphi 0, %s348
      %s365 = sphi 0, %s349
      %s371 = sphi 0, %s373
      %s374 = sphi 0, %s371
      %s375 = sphi 0, %s374
      %s391 = sphi 0, %s375
      %s397 = sphi 0, %s399
      %s400 = sphi 0, %s397
      %s401 = sphi 0, %s400
      %s417 = sphi 0, %s401
      %s423 = sphi 0, %s425
      %s426 = sphi 0, %s423
      %s427 = sphi 0, %s426
      %s443 = sphi 0, %s427
      %s449 = sphi 0, %s451
      %s452 = sphi 0, %s449
      %s453 = sphi 0, %s452
      %s469 = sphi 0, %s453
    $region4: #{_lambda_.3} parent=1 // loop_header_branch
      %40 = sbr.rel (%p38) target = $region8
    $region5: #{_lambda_.3} parent=1 // loop_body
      %s42 = ssub.s32 %s37, 1
      %s43 = ssub.s32 %s37, 2
      %s50 = sadd.s32 1, %s45
      %p51 = scmp.ge.s32.totalorder %s50, 2
      %s52 = scalar_select %p51, 0, %s50
      %s53 = sadd.s32 1, %s44
      %s54 = scalar_select %p51, %s53, %s44
      %p55 = scmp.ge.s32.totalorder %s54, 2
      %s56 = scalar_select %p55, 0, %s54
      %s57 = ssub.s32 %s44, %s56
      %p58 = scmp.eq.s32.totalorder %s57, 0
      %s60 = sadd.s32 %s59, 1
      %s61 = scalar_select %p58, %s59, %s60
      %p64 = pneg %p58
      %p65 = scmp.eq.s32.totalorder %s37, 3
      %p66 = por %p64, %p65
      %p67 = scmp.ne.s32.totalorder %s59, %s62
      %p68 = scmp.eq.s32.totalorder %s37, 0
      %p69 = por %p67, %p68
      %p70 = scmp.ne.s32.totalorder %s59, %s62
      %p71 = scmp.eq.s32.totalorder %s42, 3
      %p72 = por %p70, %p71
      %p73 = scmp.ne.s32.totalorder %s62, %s63
      %p74 = scmp.eq.s32.totalorder %s42, 0
      %p75 = por %p73, %p74
      %p76 = scmp.ne.s32.totalorder %s62, %s63
      %p77 = scmp.eq.s32.totalorder %s43, 3
      %p78 = por %p76, %p77
      %p80 = scmp.ne.s32.totalorder %s63, %s79
      %p81 = scmp.eq.s32.totalorder %s43, 0
      %p82 = por %p80, %p81
      %s83 = ssub.s32 %s44, %s56
      %p84 = scmp.eq.s32.totalorder %s83, 0
      %s86 = sadd.s32 %s85, 1
      %s87 = scalar_select %p84, %s85, %s86
      %p90 = pneg %p84
      %p91 = scmp.eq.s32.totalorder %s37, 3
      %p92 = por %p90, %p91
      %p93 = scmp.ne.s32.totalorder %s85, %s88
      %p94 = scmp.eq.s32.totalorder %s37, 0
      %p95 = por %p93, %p94
      %p96 = scmp.ne.s32.totalorder %s85, %s88
      %p97 = scmp.eq.s32.totalorder %s42, 3
      %p98 = por %p96, %p97
      %p99 = scmp.ne.s32.totalorder %s88, %s89
      %p100 = scmp.eq.s32.totalorder %s42, 0
      %p101 = por %p99, %p100
      %p102 = scmp.ne.s32.totalorder %s88, %s89
      %p103 = scmp.eq.s32.totalorder %s43, 3
      %p104 = por %p102, %p103
      %p106 = scmp.ne.s32.totalorder %s89, %s105
      %p107 = scmp.eq.s32.totalorder %s43, 0
      %p108 = por %p106, %p107
      %s109 = ssub.s32 %s45, %s52
      %p110 = scmp.eq.s32.totalorder %s109, 0
      %s112 = sadd.s32 %s111, 1
      %s113 = scalar_select %p110, %s111, %s112
      %p116 = pneg %p110
      %p117 = scmp.eq.s32.totalorder %s37, 3
      %p118 = por %p116, %p117
      %p119 = scmp.ne.s32.totalorder %s111, %s114
      %p120 = scmp.eq.s32.totalorder %s37, 0
      %p121 = por %p119, %p120
      %p122 = scmp.ne.s32.totalorder %s111, %s114
      %p123 = scmp.eq.s32.totalorder %s42, 3
      %p124 = por %p122, %p123
      %p125 = scmp.ne.s32.totalorder %s114, %s115
      %p126 = scmp.eq.s32.totalorder %s42, 0
      %p127 = por %p125, %p126
      %p128 = scmp.ne.s32.totalorder %s114, %s115
      %p129 = scmp.eq.s32.totalorder %s43, 3
      %p130 = por %p128, %p129
      %p132 = scmp.ne.s32.totalorder %s115, %s131
      %p133 = scmp.eq.s32.totalorder %s43, 0
      %p134 = por %p132, %p133
      %s135 = ssub.s32 %s45, %s52
      %p136 = scmp.eq.s32.totalorder %s135, 0
      %s138 = sadd.s32 %s137, 1
      %s139 = scalar_select %p136, %s137, %s138
      %p142 = pneg %p136
      %p143 = scmp.eq.s32.totalorder %s37, 3
      %p144 = por %p142, %p143
      %p145 = scmp.ne.s32.totalorder %s137, %s140
      %p146 = scmp.eq.s32.totalorder %s37, 0
      %p147 = por %p145, %p146
      %p148 = scmp.ne.s32.totalorder %s137, %s140
      %p149 = scmp.eq.s32.totalorder %s42, 3
      %p150 = por %p148, %p149
      %p151 = scmp.ne.s32.totalorder %s140, %s141
      %p152 = scmp.eq.s32.totalorder %s42, 0
      %p153 = por %p151, %p152
      %p154 = scmp.ne.s32.totalorder %s140, %s141
      %p155 = scmp.eq.s32.totalorder %s43, 3
      %p156 = por %p154, %p155
      %p158 = scmp.ne.s32.totalorder %s141, %s157
      %p159 = scmp.eq.s32.totalorder %s43, 0
      %p160 = por %p158, %p159
      %s161 = ssub.s32 %s45, %s52
      %p162 = scmp.eq.s32.totalorder %s161, 0
      %s164 = sadd.s32 %s163, 1
      %s165 = scalar_select %p162, %s163, %s164
      %p168 = pneg %p162
      %p169 = scmp.eq.s32.totalorder %s37, 3
      %p170 = por %p168, %p169
      %p171 = scmp.ne.s32.totalorder %s163, %s166
      %p172 = scmp.eq.s32.totalorder %s37, 0
      %p173 = por %p171, %p172
      %p174 = scmp.ne.s32.totalorder %s163, %s166
      %p175 = scmp.eq.s32.totalorder %s42, 3
      %p176 = por %p174, %p175
      %p177 = scmp.ne.s32.totalorder %s166, %s167
      %p178 = scmp.eq.s32.totalorder %s42, 0
      %p179 = por %p177, %p178
      %p180 = scmp.ne.s32.totalorder %s166, %s167
      %p181 = scmp.eq.s32.totalorder %s43, 3
      %p182 = por %p180, %p181
      %p184 = scmp.ne.s32.totalorder %s167, %s183
      %p185 = scmp.eq.s32.totalorder %s43, 0
      %p186 = por %p184, %p185
      %s187 = ssub.s32 %s45, %s52
      %p188 = scmp.eq.s32.totalorder %s187, 0
      %s190 = sadd.s32 %s189, 1
      %s191 = scalar_select %p188, %s189, %s190
      %p194 = pneg %p188
      %p195 = scmp.eq.s32.totalorder %s37, 3
      %p196 = por %p194, %p195
      %p197 = scmp.ne.s32.totalorder %s189, %s192
      %p198 = scmp.eq.s32.totalorder %s37, 0
      %p199 = por %p197, %p198
      %p200 = scmp.ne.s32.totalorder %s189, %s192
      %p201 = scmp.eq.s32.totalorder %s42, 3
      %p202 = por %p200, %p201
      %p203 = scmp.ne.s32.totalorder %s192, %s193
      %p204 = scmp.eq.s32.totalorder %s42, 0
      %p205 = por %p203, %p204
      %p206 = scmp.ne.s32.totalorder %s192, %s193
      %p207 = scmp.eq.s32.totalorder %s43, 3
      %p208 = por %p206, %p207
      %p210 = scmp.ne.s32.totalorder %s193, %s209
      %p211 = scmp.eq.s32.totalorder %s43, 0
      %p212 = por %p210, %p211
      %s213 = ssub.s32 %s45, %s52
      %p214 = scmp.eq.s32.totalorder %s213, 0
      %s216 = sadd.s32 %s215, 1
      %s217 = scalar_select %p214, %s215, %s216
      %p220 = pneg %p214
      %p221 = scmp.eq.s32.totalorder %s37, 3
      %p222 = por %p220, %p221
      %p223 = scmp.ne.s32.totalorder %s215, %s218
      %p224 = scmp.eq.s32.totalorder %s37, 0
      %p225 = por %p223, %p224
      %p226 = scmp.ne.s32.totalorder %s215, %s218
      %p227 = scmp.eq.s32.totalorder %s42, 3
      %p228 = por %p226, %p227
      %p229 = scmp.ne.s32.totalorder %s218, %s219
      %p230 = scmp.eq.s32.totalorder %s42, 0
      %p231 = por %p229, %p230
      %p232 = scmp.ne.s32.totalorder %s218, %s219
      %p233 = scmp.eq.s32.totalorder %s43, 3
      %p234 = por %p232, %p233
      %p236 = scmp.ne.s32.totalorder %s219, %s235
      %p237 = scmp.eq.s32.totalorder %s43, 0
      %p238 = por %p236, %p237
      %s239 = ssub.s32 %s45, %s52
      %p240 = scmp.eq.s32.totalorder %s239, 0
      %s242 = sadd.s32 %s241, 1
      %s243 = scalar_select %p240, %s241, %s242
      %p246 = pneg %p240
      %p247 = scmp.eq.s32.totalorder %s37, 3
      %p248 = por %p246, %p247
      %p249 = scmp.ne.s32.totalorder %s241, %s244
      %p250 = scmp.eq.s32.totalorder %s37, 0
      %p251 = por %p249, %p250
      %p252 = scmp.ne.s32.totalorder %s241, %s244
      %p253 = scmp.eq.s32.totalorder %s42, 3
      %p254 = por %p252, %p253
      %p255 = scmp.ne.s32.totalorder %s244, %s245
      %p256 = scmp.eq.s32.totalorder %s42, 0
      %p257 = por %p255, %p256
      %p258 = scmp.ne.s32.totalorder %s244, %s245
      %p259 = scmp.eq.s32.totalorder %s43, 3
      %p260 = por %p258, %p259
      %p262 = scmp.ne.s32.totalorder %s245, %s261
      %p263 = scmp.eq.s32.totalorder %s43, 0
      %p264 = por %p262, %p263
      %s265 = ssub.s32 %s45, %s52
      %p266 = scmp.eq.s32.totalorder %s265, 0
      %s268 = sadd.s32 %s267, 1
      %s269 = scalar_select %p266, %s267, %s268
      %p272 = pneg %p266
      %p273 = scmp.eq.s32.totalorder %s37, 3
      %p274 = por %p272, %p273
      %p275 = scmp.ne.s32.totalorder %s267, %s270
      %p276 = scmp.eq.s32.totalorder %s37, 0
      %p277 = por %p275, %p276
      %p278 = scmp.ne.s32.totalorder %s267, %s270
      %p279 = scmp.eq.s32.totalorder %s42, 3
      %p280 = por %p278, %p279
      %p281 = scmp.ne.s32.totalorder %s270, %s271
      %p282 = scmp.eq.s32.totalorder %s42, 0
      %p283 = por %p281, %p282
      %p284 = scmp.ne.s32.totalorder %s270, %s271
      %p285 = scmp.eq.s32.totalorder %s43, 3
      %p286 = por %p284, %p285
      %p288 = scmp.ne.s32.totalorder %s271, %s287
      %p289 = scmp.eq.s32.totalorder %s43, 0
      %p290 = por %p288, %p289
      %s291 = ssub.s32 %s45, %s52
      %p292 = scmp.eq.s32.totalorder %s291, 0
      %s294 = sadd.s32 %s293, 1
      %s295 = scalar_select %p292, %s293, %s294
      %p298 = pneg %p292
      %p299 = scmp.eq.s32.totalorder %s37, 3
      %p300 = por %p298, %p299
      %p301 = scmp.ne.s32.totalorder %s293, %s296
      %p302 = scmp.eq.s32.totalorder %s37, 0
      %p303 = por %p301, %p302
      %p304 = scmp.ne.s32.totalorder %s293, %s296
      %p305 = scmp.eq.s32.totalorder %s42, 3
      %p306 = por %p304, %p305
      %p307 = scmp.ne.s32.totalorder %s296, %s297
      %p308 = scmp.eq.s32.totalorder %s42, 0
      %p309 = por %p307, %p308
      %p310 = scmp.ne.s32.totalorder %s296, %s297
      %p311 = scmp.eq.s32.totalorder %s43, 3
      %p312 = por %p310, %p311
      %p314 = scmp.ne.s32.totalorder %s297, %s313
      %p315 = scmp.eq.s32.totalorder %s43, 0
      %p316 = por %p314, %p315
      %s317 = ssub.s32 %s45, %s52
      %p318 = scmp.eq.s32.totalorder %s317, 0
      %s320 = sadd.s32 %s319, 1
      %s321 = scalar_select %p318, %s319, %s320
      %p324 = pneg %p318
      %p325 = scmp.eq.s32.totalorder %s37, 3
      %p326 = por %p324, %p325
      %p327 = scmp.ne.s32.totalorder %s319, %s322
      %p328 = scmp.eq.s32.totalorder %s37, 0
      %p329 = por %p327, %p328
      %p330 = scmp.ne.s32.totalorder %s319, %s322
      %p331 = scmp.eq.s32.totalorder %s42, 3
      %p332 = por %p330, %p331
      %p333 = scmp.ne.s32.totalorder %s322, %s323
      %p334 = scmp.eq.s32.totalorder %s42, 0
      %p335 = por %p333, %p334
      %p336 = scmp.ne.s32.totalorder %s322, %s323
      %p337 = scmp.eq.s32.totalorder %s43, 3
      %p338 = por %p336, %p337
      %p340 = scmp.ne.s32.totalorder %s323, %s339
      %p341 = scmp.eq.s32.totalorder %s43, 0
      %p342 = por %p340, %p341
      %s343 = ssub.s32 %s45, %s52
      %p344 = scmp.eq.s32.totalorder %s343, 0
      %s346 = sadd.s32 %s345, 1
      %s347 = scalar_select %p344, %s345, %s346
      %p350 = pneg %p344
      %p351 = scmp.eq.s32.totalorder %s37, 3
      %p352 = por %p350, %p351
      %p353 = scmp.ne.s32.totalorder %s345, %s348
      %p354 = scmp.eq.s32.totalorder %s37, 0
      %p355 = por %p353, %p354
      %p356 = scmp.ne.s32.totalorder %s345, %s348
      %p357 = scmp.eq.s32.totalorder %s42, 3
      %p358 = por %p356, %p357
      %p359 = scmp.ne.s32.totalorder %s348, %s349
      %p360 = scmp.eq.s32.totalorder %s42, 0
      %p361 = por %p359, %p360
      %p362 = scmp.ne.s32.totalorder %s348, %s349
      %p363 = scmp.eq.s32.totalorder %s43, 3
      %p364 = por %p362, %p363
      %p366 = scmp.ne.s32.totalorder %s349, %s365
      %p367 = scmp.eq.s32.totalorder %s43, 0
      %p368 = por %p366, %p367
      %s369 = ssub.s32 %s45, %s52
      %p370 = scmp.eq.s32.totalorder %s369, 0
      %s372 = sadd.s32 %s371, 1
      %s373 = scalar_select %p370, %s371, %s372
      %p376 = pneg %p370
      %p377 = scmp.eq.s32.totalorder %s37, 3
      %p378 = por %p376, %p377
      %p379 = scmp.ne.s32.totalorder %s371, %s374
      %p380 = scmp.eq.s32.totalorder %s37, 0
      %p381 = por %p379, %p380
      %p382 = scmp.ne.s32.totalorder %s371, %s374
      %p383 = scmp.eq.s32.totalorder %s42, 3
      %p384 = por %p382, %p383
      %p385 = scmp.ne.s32.totalorder %s374, %s375
      %p386 = scmp.eq.s32.totalorder %s42, 0
      %p387 = por %p385, %p386
      %p388 = scmp.ne.s32.totalorder %s374, %s375
      %p389 = scmp.eq.s32.totalorder %s43, 3
      %p390 = por %p388, %p389
      %p392 = scmp.ne.s32.totalorder %s375, %s391
      %p393 = scmp.eq.s32.totalorder %s43, 0
      %p394 = por %p392, %p393
      %s395 = ssub.s32 %s45, %s52
      %p396 = scmp.eq.s32.totalorder %s395, 0
      %s398 = sadd.s32 %s397, 1
      %s399 = scalar_select %p396, %s397, %s398
      %p402 = pneg %p396
      %p403 = scmp.eq.s32.totalorder %s37, 3
      %p404 = por %p402, %p403
      %p405 = scmp.ne.s32.totalorder %s397, %s400
      %p406 = scmp.eq.s32.totalorder %s37, 0
      %p407 = por %p405, %p406
      %p408 = scmp.ne.s32.totalorder %s397, %s400
      %p409 = scmp.eq.s32.totalorder %s42, 3
      %p410 = por %p408, %p409
      %p411 = scmp.ne.s32.totalorder %s400, %s401
      %p412 = scmp.eq.s32.totalorder %s42, 0
      %p413 = por %p411, %p412
      %p414 = scmp.ne.s32.totalorder %s400, %s401
      %p415 = scmp.eq.s32.totalorder %s43, 3
      %p416 = por %p414, %p415
      %p418 = scmp.ne.s32.totalorder %s401, %s417
      %p419 = scmp.eq.s32.totalorder %s43, 0
      %p420 = por %p418, %p419
      %s421 = ssub.s32 %s44, %s56
      %p422 = scmp.eq.s32.totalorder %s421, 0
      %s424 = sadd.s32 %s423, 1
      %s425 = scalar_select %p422, %s423, %s424
      %p428 = pneg %p422
      %p429 = scmp.eq.s32.totalorder %s37, 3
      %p430 = por %p428, %p429
      %p431 = scmp.ne.s32.totalorder %s423, %s426
      %p432 = scmp.eq.s32.totalorder %s37, 0
      %p433 = por %p431, %p432
      %p434 = scmp.ne.s32.totalorder %s423, %s426
      %p435 = scmp.eq.s32.totalorder %s42, 3
      %p436 = por %p434, %p435
      %p437 = scmp.ne.s32.totalorder %s426, %s427
      %p438 = scmp.eq.s32.totalorder %s42, 0
      %p439 = por %p437, %p438
      %p440 = scmp.ne.s32.totalorder %s426, %s427
      %p441 = scmp.eq.s32.totalorder %s43, 3
      %p442 = por %p440, %p441
      %p444 = scmp.ne.s32.totalorder %s427, %s443
      %p445 = scmp.eq.s32.totalorder %s43, 0
      %p446 = por %p444, %p445
      %s447 = ssub.s32 %s44, %s56
      %p448 = scmp.eq.s32.totalorder %s447, 0
      %s450 = sadd.s32 %s449, 1
      %s451 = scalar_select %p448, %s449, %s450
      %p454 = pneg %p448
      %p455 = scmp.eq.s32.totalorder %s37, 3
      %p456 = por %p454, %p455
      %p457 = scmp.ne.s32.totalorder %s449, %s452
      %p458 = scmp.eq.s32.totalorder %s37, 0
      %p459 = por %p457, %p458
      %p460 = scmp.ne.s32.totalorder %s449, %s452
      %p461 = scmp.eq.s32.totalorder %s42, 3
      %p462 = por %p460, %p461
      %p463 = scmp.ne.s32.totalorder %s452, %s453
      %p464 = scmp.eq.s32.totalorder %s42, 0
      %p465 = por %p463, %p464
      %p466 = scmp.ne.s32.totalorder %s452, %s453
      %p467 = scmp.eq.s32.totalorder %s43, 3
      %p468 = por %p466, %p467
      %p470 = scmp.ne.s32.totalorder %s453, %s469
      %p471 = scmp.eq.s32.totalorder %s43, 0
      %p472 = por %p470, %p471
      %p473 = scmp.le.s32.totalorder 1, %s37
      %p474 = scmp.lt.s32.totalorder %s37, 5
      %p475 = pnand %p473, %p474
      %p476 = pneg %p475
      // Predicated region
      $region9: #{_lambda_.3} parent=5 // pred_check
        _
      $region10: #{_lambda_.3} parent=5 // pred_check_branch
        %478 = sbr.rel (%p475) target = $region12
      $region11: #{_lambda_.3} parent=5 // pred_region
        %s479 = ssub.s32 %s37, 1
      $region12: #{_lambda_.3} parent=5 // pred_fallthru
        _
      %p480 = scmp.lt.s32.totalorder %s37, 4
      // Predicated region
      $region13: #{_lambda_.3} parent=5 // pred_check
        %p481 = pneg %p480
      $region14: #{_lambda_.3} parent=5 // pred_check_branch
        %483 = sbr.rel (%p481) target = $region16
      $region15: #{_lambda_.3} parent=5 // pred_region
        // Predicated region
        $region17: #{_lambda_.3} parent=15 // pred_check
          %p484 = pneg %p69
        $region18: #{_lambda_.3} parent=15 // pred_check_branch
          %486 = sbr.rel (%p484) target = $region20
        $region19: #{_lambda_.3} parent=15 // pred_region
          %p487 = scmp.lt.s32.totalorder %s44, 1
          %s488 = scalar_select %p487, %s44, 1
          %s489 = smul.addr %s488, 8
          %s490 = scalar_lea.vmem %s0, %s489
        $region20: #{_lambda_.3} parent=15 // pred_fallthru
          _
        // Predicated region
        $region21: #{_lambda_.3} parent=15 // pred_check
          %p491 = pneg %p95
        $region22: #{_lambda_.3} parent=15 // pred_check_branch
          %493 = sbr.rel (%p491) target = $region24
        $region23: #{_lambda_.3} parent=15 // pred_region
          %p494 = scmp.lt.s32.totalorder %s44, 1
          %s495 = scalar_select %p494, %s44, 1
          %s496 = scalar_lea.vmem %s1, %s495
        $region24: #{_lambda_.3} parent=15 // pred_fallthru
          _
        // Predicated region
        $region25: #{_lambda_.3} parent=15 // pred_check
          %p497 = pneg %p121
        $region26: #{_lambda_.3} parent=15 // pred_check_branch
          %499 = sbr.rel (%p497) target = $region28
        $region27: #{_lambda_.3} parent=15 // pred_region
          %p500 = scmp.lt.s32.totalorder %s45, 1
          %s501 = scalar_select %p500, %s45, 1
          %s502 = scalar_lea.vmem %s2, %s501
        $region28: #{_lambda_.3} parent=15 // pred_fallthru
          _
        // Predicated region
        $region29: #{_lambda_.3} parent=15 // pred_check
          %p503 = pneg %p147
        $region30: #{_lambda_.3} parent=15 // pred_check_branch
          %505 = sbr.rel (%p503) target = $region32
        $region31: #{_lambda_.3} parent=15 // pred_region
          %p506 = scmp.lt.s32.totalorder %s45, 1
          %s507 = scalar_select %p506, %s45, 1
          %s508 = scalar_lea.vmem %s3, %s507
        $region32: #{_lambda_.3} parent=15 // pred_fallthru
          _
        // Predicated region
        $region33: #{_lambda_.3} parent=15 // pred_check
          %p509 = pneg %p173
        $region34: #{_lambda_.3} parent=15 // pred_check_branch
          %511 = sbr.rel (%p509) target = $region36
        $region35: #{_lambda_.3} parent=15 // pred_region
          %s512 = sand.u32 %s163, 1
          %s513 = scalar_lea.sflag [#allocation4], %s512
          %s514 = sand.u32 %s163, 1
          %s515 = smul.addr %s514, 16
          %s516 = scalar_lea.vmem [#allocation3], %s515
          %518 = vsyncadd %s513, 0
          %s519 = smul.addr %s45, 4
          %s520 = smul.addr %s519, 4
          %s521 = scalar_lea.hbm %s4, %s520
          %s522 = sshll.u32 %s521, 4
          %s523 = int_to_ptr.hbm [resolvable:$true] %s522
          %s524 = sshll.u32 %s516, 4
          %s525 = int_to_ptr.vmem [resolvable:$true] %s524
          %530 = dma.hbm_to_vmem [thread:$0]  %s523, 256, %s525, %s513, 64, 64, 4
        $region36: #{_lambda_.3} parent=15 // pred_fallthru
          _
        // Predicated region
        $region37: #{_lambda_.3} parent=15 // pred_check
          %p531 = pneg %p199
        $region38: #{_lambda_.3} parent=15 // pred_check_branch
          %533 = sbr.rel (%p531) target = $region40
        $region39: #{_lambda_.3} parent=15 // pred_region
          %p534 = scmp.lt.s32.totalorder %s45, 1
          %s535 = scalar_select %p534, %s45, 1
          %s536 = scalar_lea.vmem %s5, %s535
        $region40: #{_lambda_.3} parent=15 // pred_fallthru
          _
        // Predicated region
        $region41: #{_lambda_.3} parent=15 // pred_check
          %p537 = pneg %p225
        $region42: #{_lambda_.3} parent=15 // pred_check_branch
          %539 = sbr.rel (%p537) target = $region44
        $region43: #{_lambda_.3} parent=15 // pred_region
          %s540 = sand.u32 %s37, 1
          %s541 = scalar_lea.sflag [#allocation7], %s540
          %s542 = sand.u32 %s215, 1
          %s543 = smul.addr %s542, 16
          %s544 = scalar_lea.vmem [#allocation6], %s543
          %546 = vsyncadd %s541, 0
          %s547 = smul.addr %s45, 4
          %s548 = smul.addr %s547, 4
          %s549 = scalar_lea.hbm %s6, %s548
          %s550 = sshll.u32 %s549, 4
          %s551 = int_to_ptr.hbm [resolvable:$true] %s550
          %s552 = sshll.u32 %s544, 4
          %s553 = int_to_ptr.vmem [resolvable:$true] %s552
          %558 = dma.hbm_to_vmem [thread:$0]  %s551, 256, %s553, %s541, 64, 64, 4
        $region44: #{_lambda_.3} parent=15 // pred_fallthru
          _
        // Predicated region
        $region45: #{_lambda_.3} parent=15 // pred_check
          %p559 = pneg %p251
        $region46: #{_lambda_.3} parent=15 // pred_check_branch
          %561 = sbr.rel (%p559) target = $region48
        $region47: #{_lambda_.3} parent=15 // pred_region
          %p562 = scmp.lt.s32.totalorder %s45, 1
          %s563 = scalar_select %p562, %s45, 1
          %s564 = scalar_lea.vmem %s7, %s563
        $region48: #{_lambda_.3} parent=15 // pred_fallthru
          _
        // Predicated region
        $region49: #{_lambda_.3} parent=15 // pred_check
          %p565 = pneg %p277
        $region50: #{_lambda_.3} parent=15 // pred_check_branch
          %567 = sbr.rel (%p565) target = $region52
        $region51: #{_lambda_.3} parent=15 // pred_region
          %p568 = scmp.lt.s32.totalorder %s45, 1
          %s569 = scalar_select %p568, %s45, 1
          %s570 = scalar_lea.vmem %s8, %s569
        $region52: #{_lambda_.3} parent=15 // pred_fallthru
          _
        // Predicated region
        $region53: #{_lambda_.3} parent=15 // pred_check
          %p571 = pneg %p303
        $region54: #{_lambda_.3} parent=15 // pred_check_branch
          %573 = sbr.rel (%p571) target = $region56
        $region55: #{_lambda_.3} parent=15 // pred_region
          %p574 = scmp.lt.s32.totalorder %s45, 1
          %s575 = scalar_select %p574, %s45, 1
          %s576 = scalar_lea.vmem %s9, %s575
        $region56: #{_lambda_.3} parent=15 // pred_fallthru
          _
        // Predicated region
        $region57: #{_lambda_.3} parent=15 // pred_check
          %p577 = pneg %p329
        $region58: #{_lambda_.3} parent=15 // pred_check_branch
          %579 = sbr.rel (%p577) target = $region60
        $region59: #{_lambda_.3} parent=15 // pred_region
          %s580 = sand.u32 %s37, 1
          %s581 = scalar_lea.sflag [#allocation7], %s580
          %s582 = sand.u32 %s319, 1
          %s583 = smul.addr %s582, 16
          %s584 = scalar_lea.vmem [#allocation8], %s583
          %586 = vsyncadd %s581, 0
          %s587 = smul.addr %s45, 4
          %s588 = smul.addr %s587, 4
          %s589 = scalar_lea.hbm %s10, %s588
          %s590 = sshll.u32 %s589, 4
          %s591 = int_to_ptr.hbm [resolvable:$true] %s590
          %s592 = sshll.u32 %s584, 4
          %s593 = int_to_ptr.vmem [resolvable:$true] %s592
          %598 = dma.hbm_to_vmem [thread:$0]  %s591, 256, %s593, %s581, 64, 64, 4
        $region60: #{_lambda_.3} parent=15 // pred_fallthru
          _
        // Predicated region
        $region61: #{_lambda_.3} parent=15 // pred_check
          %p599 = pneg %p355
        $region62: #{_lambda_.3} parent=15 // pred_check_branch
          %601 = sbr.rel (%p599) target = $region64
        $region63: #{_lambda_.3} parent=15 // pred_region
          %p602 = scmp.lt.s32.totalorder %s45, 1
          %s603 = scalar_select %p602, %s45, 1
          %s604 = scalar_lea.vmem %s11, %s603
        $region64: #{_lambda_.3} parent=15 // pred_fallthru
          _
        // Predicated region
        $region65: #{_lambda_.3} parent=15 // pred_check
          %p605 = pneg %p381
        $region66: #{_lambda_.3} parent=15 // pred_check_branch
          %607 = sbr.rel (%p605) target = $region68
        $region67: #{_lambda_.3} parent=15 // pred_region
          %s608 = sand.u32 %s371, 1
          %s609 = scalar_lea.sflag [#allocation10], %s608
          %s610 = sand.u32 %s371, 1
          %s611 = smul.addr %s610, 32
          %s612 = scalar_lea.vmem [#allocation9], %s611
          %614 = vsyncadd %s609, 0
          %s615 = smul.addr %s45, 8
          %s616 = smul.addr %s615, 4
          %s617 = scalar_lea.hbm %s12, %s616
          %s618 = sshll.u32 %s617, 4
          %s619 = int_to_ptr.hbm [resolvable:$true] %s618
          %s620 = sshll.u32 %s612, 4
          %s621 = int_to_ptr.vmem [resolvable:$true] %s620
          %626 = dma.hbm_to_vmem [thread:$0]  %s619, 512, %s621, %s609, 64, 64, 4
        $region68: #{_lambda_.3} parent=15 // pred_fallthru
          _
        // Predicated region
        $region69: #{_lambda_.3} parent=15 // pred_check
          %p627 = pneg %p407
        $region70: #{_lambda_.3} parent=15 // pred_check_branch
          %629 = sbr.rel (%p627) target = $region72
        $region71: #{_lambda_.3} parent=15 // pred_region
          %p630 = scmp.lt.s32.totalorder %s45, 1
          %s631 = scalar_select %p630, %s45, 1
          %s632 = scalar_lea.vmem %s13, %s631
        $region72: #{_lambda_.3} parent=15 // pred_fallthru
          _
      $region16: #{_lambda_.3} parent=5 // pred_fallthru
        _
      %p633 = scmp.le.s32.totalorder 1, %s37
      %p634 = scmp.lt.s32.totalorder %s37, 5
      %p635 = pnand %p633, %p634
      %p636 = pneg %p635
      // Predicated region
      $region73: #{_lambda_.3} parent=5 // pred_check
        _
      $region74: #{_lambda_.3} parent=5 // pred_check_branch
        %638 = sbr.rel (%p635) target = $region76
      $region75: #{_lambda_.3} parent=5 // pred_region
        %s639 = ssub.s32 %s37, 1
        %s640 = sand.u32 %s166, 1
        %s641 = scalar_lea.sflag [#allocation4], %s640
        %s642 = sand.u32 %s166, 1
        %s643 = smul.addr %s642, 16
        %s644 = scalar_lea.vmem [#allocation3], %s643
        // Predicated region
        $region77: #{_lambda_.3} parent=75 // pred_check
          %p645 = pneg %p179
        $region78: #{_lambda_.3} parent=75 // pred_check_branch
          %647 = sbr.rel (%p645) target = $region80
        $region79: #{_lambda_.3} parent=75 // pred_region
          %649 = dma.done %s641, 256
        $region80: #{_lambda_.3} parent=75 // pred_fallthru
          _
        %s650 = sand.u32 %s42, 1
        %s651 = scalar_lea.sflag [#allocation7], %s650
        %s652 = sand.u32 %s218, 1
        %s653 = smul.addr %s652, 16
        %s654 = scalar_lea.vmem [#allocation6], %s653
        // Predicated region
        $region81: #{_lambda_.3} parent=75 // pred_check
          %p655 = pneg %p231
        $region82: #{_lambda_.3} parent=75 // pred_check_branch
          %657 = sbr.rel (%p655) target = $region84
        $region83: #{_lambda_.3} parent=75 // pred_region
          %659 = dma.done %s651, 256
        $region84: #{_lambda_.3} parent=75 // pred_fallthru
          _
        %s660 = sand.u32 %s42, 1
        %s661 = scalar_lea.sflag [#allocation7], %s660
        %s662 = sand.u32 %s322, 1
        %s663 = smul.addr %s662, 16
        %s664 = scalar_lea.vmem [#allocation8], %s663
        // Predicated region
        $region85: #{_lambda_.3} parent=75 // pred_check
          %p665 = pneg %p335
        $region86: #{_lambda_.3} parent=75 // pred_check_branch
          %667 = sbr.rel (%p665) target = $region88
        $region87: #{_lambda_.3} parent=75 // pred_region
          %669 = dma.done %s661, 256
        $region88: #{_lambda_.3} parent=75 // pred_fallthru
          _
        %s670 = sand.u32 %s374, 1
        %s671 = scalar_lea.sflag [#allocation10], %s670
        %s672 = sand.u32 %s374, 1
        %s673 = smul.addr %s672, 32
        %s674 = scalar_lea.vmem [#allocation9], %s673
        // Predicated region
        $region89: #{_lambda_.3} parent=75 // pred_check
          %p675 = pneg %p387
        $region90: #{_lambda_.3} parent=75 // pred_check_branch
          %677 = sbr.rel (%p675) target = $region92
        $region91: #{_lambda_.3} parent=75 // pred_region
          %679 = dma.done %s671, 512
        $region92: #{_lambda_.3} parent=75 // pred_fallthru
          _
        %p680 = scmp.lt.s32.totalorder %s46, 1
        %s681 = scalar_select %p680, %s46, 1
        %s682 = smul.addr %s681, 8
        %s683 = scalar_lea.vmem %s0, %s682
        %p684 = pneg %p75
        %p685 = pneg %p72
        %p686 = scmp.lt.s32.totalorder %s46, 1
        %s687 = scalar_select %p686, %s46, 1
        %s688 = scalar_lea.vmem %s1, %s687
        %p689 = pneg %p101
        %p690 = pneg %p98
        %p691 = scmp.lt.s32.totalorder %s47, 1
        %s692 = scalar_select %p691, %s47, 1
        %s693 = scalar_lea.vmem %s2, %s692
        %p694 = pneg %p127
        %p695 = pneg %p124
        %p696 = scmp.lt.s32.totalorder %s47, 1
        %s697 = scalar_select %p696, %s47, 1
        %s698 = scalar_lea.vmem %s3, %s697
        %p699 = pneg %p153
        %p700 = pneg %p150
        %s701 = sand.u32 %s166, 1
        %s702 = scalar_lea.sflag [#allocation4], %s701
        %s703 = sand.u32 %s166, 1
        %s704 = smul.addr %s703, 16
        %s705 = scalar_lea.vmem [#allocation3], %s704
        %p706 = pneg %p179
        %p707 = pneg %p176
        %p708 = scmp.lt.s32.totalorder %s47, 1
        %s709 = scalar_select %p708, %s47, 1
        %s710 = scalar_lea.vmem %s5, %s709
        %p711 = pneg %p205
        %p712 = pneg %p202
        %s713 = sand.u32 %s42, 1
        %s714 = scalar_lea.sflag [#allocation7], %s713
        %s715 = sand.u32 %s218, 1
        %s716 = smul.addr %s715, 16
        %s717 = scalar_lea.vmem [#allocation6], %s716
        %p718 = pneg %p231
        %p719 = pneg %p228
        %p720 = scmp.lt.s32.totalorder %s47, 1
        %s721 = scalar_select %p720, %s47, 1
        %s722 = scalar_lea.vmem %s7, %s721
        %p723 = pneg %p257
        %p724 = pneg %p254
        %p725 = scmp.lt.s32.totalorder %s47, 1
        %s726 = scalar_select %p725, %s47, 1
        %s727 = scalar_lea.vmem %s8, %s726
        %p728 = pneg %p283
        %p729 = pneg %p280
        %p730 = scmp.lt.s32.totalorder %s47, 1
        %s731 = scalar_select %p730, %s47, 1
        %s732 = scalar_lea.vmem %s9, %s731
        %p733 = pneg %p309
        %p734 = pneg %p306
        %s735 = sand.u32 %s42, 1
        %s736 = scalar_lea.sflag [#allocation7], %s735
        %s737 = sand.u32 %s322, 1
        %s738 = smul.addr %s737, 16
        %s739 = scalar_lea.vmem [#allocation8], %s738
        %p740 = pneg %p335
        %p741 = pneg %p332
        %p742 = scmp.lt.s32.totalorder %s47, 1
        %s743 = scalar_select %p742, %s47, 1
        %s744 = scalar_lea.vmem %s11, %s743
        %p745 = pneg %p361
        %p746 = pneg %p358
        %s747 = sand.u32 %s374, 1
        %s748 = scalar_lea.sflag [#allocation10], %s747
        %s749 = sand.u32 %s374, 1
        %s750 = smul.addr %s749, 32
        %s751 = scalar_lea.vmem [#allocation9], %s750
        %p752 = pneg %p387
        %p753 = pneg %p384
        %p754 = scmp.lt.s32.totalorder %s47, 1
        %s755 = scalar_select %p754, %s47, 1
        %s756 = scalar_lea.vmem %s13, %s755
        %p757 = pneg %p413
        %p758 = pneg %p410
        %p759 = pneg %p439
        %p760 = pneg %p436
        %s761 = sand.u32 %s426, 1
        %s762 = scalar_lea.sflag [#allocation5], %s761
        %s763 = sand.u32 %s426, 1
        %s764 = smul.addr %s763, 8
        %s765 = scalar_lea.vmem [#allocation11], %s764
        %p766 = pneg %p465
        %p767 = pneg %p462
        %s768 = sand.u32 %s452, 1
        %s769 = scalar_lea.sflag [#allocation13], %s768
        %s770 = sand.u32 %s452, 1
        %s771 = smul.addr %s770, 32
        %s772 = scalar_lea.vmem [#allocation12], %s771
        %p773 = scmp.lt.s32.totalorder %s46, 1
        %s774 = scalar_select %p773, %s46, 1
        %s775 = smul.addr %s774, 8
        %s776 = scalar_lea.vmem %s0, %s775
        %p777 = scmp.lt.s32.totalorder %s46, 1
        %s778 = scalar_select %p777, %s46, 1
        %s779 = scalar_lea.vmem %s1, %s778
        %p780 = scmp.lt.s32.totalorder %s47, 1
        %s781 = scalar_select %p780, %s47, 1
        %s782 = scalar_lea.vmem %s2, %s781
        %p783 = scmp.lt.s32.totalorder %s47, 1
        %s784 = scalar_select %p783, %s47, 1
        %s785 = scalar_lea.vmem %s3, %s784
        %p786 = scmp.lt.s32.totalorder %s47, 1
        %s787 = scalar_select %p786, %s47, 1
        %s788 = scalar_lea.vmem %s5, %s787
        %p789 = scmp.lt.s32.totalorder %s47, 1
        %s790 = scalar_select %p789, %s47, 1
        %s791 = scalar_lea.vmem %s7, %s790
        %p792 = scmp.lt.s32.totalorder %s47, 1
        %s793 = scalar_select %p792, %s47, 1
        %s794 = scalar_lea.vmem %s8, %s793
        %p795 = scmp.lt.s32.totalorder %s47, 1
        %s796 = scalar_select %p795, %s47, 1
        %s797 = scalar_lea.vmem %s9, %s796
        %p798 = scmp.lt.s32.totalorder %s47, 1
        %s799 = scalar_select %p798, %s47, 1
        %s800 = scalar_lea.vmem %s11, %s799
        %p801 = scmp.lt.s32.totalorder %s47, 1
        %s802 = scalar_select %p801, %s47, 1
        %s803 = scalar_lea.vmem %s13, %s802
        %p805 = scmp.eq.s32.totalorder %s47, 0
        // Predicated region
        $region93: #{_lambda_.3} parent=75 // pred_check
          %p806 = pneg %p805
        $region94: #{_lambda_.3} parent=75 // pred_check_branch
          %808 = sbr.rel (%p806) target = $region96
        $region95: #{_lambda_.3} parent=75 // pred_region
          %v809 = vld [vmem:[%s776] sm:$0xff]
          %vm810 = vcmask 261120
          %811 = vst.msk [vmem:[#allocation2] sm:$0xff] %vm810, %v809
        $region96: #{_lambda_.3} parent=75 // pred_fallthru
          _
        %v812 = vld [vmem:[#allocation2] sm:$0xff]
        %v813 = vld [vmem:[%s782] sm:$0x1]
        %v814 = vld [vmem:[%s785] sm:$0x1]
        %vm815 = vcmask 261120
        %v816 = vsel %vm815, %v812, 0.0
        %817 = vadd.xlane.f32.xlu0 %v816
        %v818 = vpop.xlane.xlu0 %817
        %v819 = vrcp.pop 32.0
        %v820 = vmul.f32 32.0, %v819
        %v821 = vsub.f32 1.0, %v820
        %v822 = vmul.f32 %v819, %v821
        %v823 = vadd.f32 %v819, %v822
        %vm824 = vweird.f32 %v819
        %v825 = vsel %vm824, %v819, %v823
        %v826 = vmul.f32 %v818, %v825
        %v827 = vsub.f32 %v812, %v826
        %v828 = vmul.f32 %v827, %v827
        %v829 = vsel %vm815, %v828, 0.0
        %830 = vadd.xlane.f32.xlu0 %v829
        %v831 = vpop.xlane.xlu0 %830
        %v832 = vmul.f32 %v831, 0.032258064
        %v833 = vrsqrt.pop %v832
        %v834 = vmul.f32 %v833, %v832
        %v835 = vmul.f32 %v834, %v833
        %v836 = vmul.f32 0.5, %v835
        %v837 = vsub.f32 1.5, %v836
        %v838 = vmul.f32 %v833, %v837
        %v839 = vmul.f32 %v832, %v838
        %vm840 = vcmp.eq.f32.partialorder %v832, inf
        %v841 = vsel %vm840, %v832, %v839
        %vm842 = vcmp.eq.f32.partialorder %v832, 0.0
        %v843 = vand.u32 %v832, 2147483648
        %v844 = vsel %vm842, %v843, %v841
        %v845 = vadd.f32 %v844, 1e-06
        %v846 = vrcp.pop %v845
        %v847 = vmul.f32 %v827, %v846
        %v849 = vperm.slane %v813, 0
        %v851 = vmul.f32 %v849, %v847
        %v853 = vperm.slane %v814, 0
        %v855 = vadd.f32 %v851, %v853
        %v856 = vld [vmem:[%s644] sm:$0xf]
        %v857 = vld [vmem:[%s644 + $0x4] sm:$0xf]
        %v858 = vld [vmem:[%s644 + $0x8] sm:$0xf]
        %v859 = vld [vmem:[%s644 + $0xc] sm:$0xf]
        %v860 = vpack.c.bf16 %v855, %v855
        %v861 = vld [vmem:[%s788] sm:$0x1]
        %v863 = vperm.slane %v861, 0
        %v869 = vunpack.c.l.b16 %v856
        %v870 = vunpack.c.l.b16 %v857
        %v871 = vunpack.c.l.b16 %v858
        %v872 = vunpack.c.l.b16 %v859
        %v873 = vpack.c.b16 %v870, %v869
        %v874 = vpack.c.b16 %v872, %v871
        %v878 = vsel %vm815, %v860, 0
        %880 = vmatpush.bf16.msra.mxu0 0
        %881 = vmatpush.bf16.msra.mxu0 0
        %882 = vmatpush.bf16.msra.mxu0 0
        %883 = vmatpush.bf16.msra.mxu0 0
        %884 = vmatpush.bf16.msra.mxu0 0
        %885 = vmatpush.bf16.msra.mxu0 0
        %886 = vmatpush.bf16.msra.mxu0 %v874
        %887 = vmatpush.bf16.msra.mxu0 %v873
        %888 = vmatmul.bf16.gmra.mxu0 %v878
        %v889 = vpop.f32.mrf.mxu0
        %v890 = vadd.f32 %v863, %v889
        %v891 = vpop.f32.mrf.mxu0
        %892 = vdwg.mxu0
        %894 = vrot.lane.b32.xlu0 %v890, 120
        %v895 = vpop.permute.xlu0 %894
        %897 = vrot.lane.b32.xlu0 %v890, 112
        %v898 = vpop.permute.xlu0 %897
        %900 = vrot.lane.b32.xlu0 %v890, 104
        %v901 = vpop.permute.xlu0 %900
        %v903 = vpack.c.bf16 %v890, %v890
        %v904 = vpack.c.bf16 %v895, %v895
        %v905 = vpack.c.bf16 %v898, %v898
        %v906 = vpack.c.bf16 %v901, %v901
        %v908 = vunpack.c.l.b16 %v903
        %v909 = vpack.c.b16 %v908, %v908
        %910 = vrot.lane.b32.xlu0 %v909, 96
        %v911 = vpop.permute.xlu0 %910
        %vm912 = vcmask 64512
        %v914 = vsel %vm912, %v903, 0
        %v917 = vsel %vm912, %v911, 0
        %919 = vmatpush.bf16.xpose.msra.mxu0 0
        %920 = vmatpush.bf16.xpose.msra.mxu0 0
        %921 = vmatpush.bf16.xpose.msra.mxu0 0
        %922 = vmatpush.bf16.xpose.msra.mxu0 0
        %923 = vmatpush.bf16.xpose.msra.mxu0 0
        %924 = vmatpush.bf16.xpose.msra.mxu0 0
        %925 = vmatpush.bf16.xpose.msra.mxu0 0
        %926 = vmatpush.bf16.xpose.msra.mxu0 %v917
        %927 = vmatmul.bf16.gmra.mxu0 %v914
        %v928 = vpop.f32.mrf.mxu0
        %v929 = vadd.f32 0.0, %v928
        %v930 = vpop.f32.mrf.mxu0
        %931 = vdwg.mxu0
        %v933 = vunpack.c.l.b16 %v904
        %v934 = vpack.c.b16 %v933, %v933
        %935 = vrot.lane.b32.xlu0 %v934, 96
        %v936 = vpop.permute.xlu0 %935
        %v938 = vsel %vm912, %v904, 0
        %v941 = vsel %vm912, %v936, 0
        %943 = vmatpush.bf16.xpose.msra.mxu0 0
        %944 = vmatpush.bf16.xpose.msra.mxu0 0
        %945 = vmatpush.bf16.xpose.msra.mxu0 0
        %946 = vmatpush.bf16.xpose.msra.mxu0 0
        %947 = vmatpush.bf16.xpose.msra.mxu0 0
        %948 = vmatpush.bf16.xpose.msra.mxu0 0
        %949 = vmatpush.bf16.xpose.msra.mxu0 0
        %950 = vmatpush.bf16.xpose.msra.mxu0 %v941
        %951 = vmatmul.bf16.gmra.mxu0 %v938
        %v952 = vpop.f32.mrf.mxu0
        %v953 = vadd.f32 0.0, %v952
        %v954 = vpop.f32.mrf.mxu0
        %955 = vdwg.mxu0
        %v957 = vunpack.c.l.b16 %v905
        %v958 = vpack.c.b16 %v957, %v957
        %959 = vrot.lane.b32.xlu0 %v958, 96
        %v960 = vpop.permute.xlu0 %959
        %v962 = vsel %vm912, %v905, 0
        %v965 = vsel %vm912, %v960, 0
        %967 = vmatpush.bf16.xpose.msra.mxu0 0
        %968 = vmatpush.bf16.xpose.msra.mxu0 0
        %969 = vmatpush.bf16.xpose.msra.mxu0 0
        %970 = vmatpush.bf16.xpose.msra.mxu0 0
        %971 = vmatpush.bf16.xpose.msra.mxu0 0
        %972 = vmatpush.bf16.xpose.msra.mxu0 0
        %973 = vmatpush.bf16.xpose.msra.mxu0 0
        %974 = vmatpush.bf16.xpose.msra.mxu0 %v965
        %975 = vmatmul.bf16.gmra.mxu0 %v962
        %v976 = vpop.f32.mrf.mxu0
        %v977 = vadd.f32 0.0, %v976
        %v978 = vpop.f32.mrf.mxu0
        %979 = vdwg.mxu0
        %v981 = vunpack.c.l.b16 %v906
        %v982 = vpack.c.b16 %v981, %v981
        %983 = vrot.lane.b32.xlu0 %v982, 96
        %v984 = vpop.permute.xlu0 %983
        %v986 = vsel %vm912, %v906, 0
        %v989 = vsel %vm912, %v984, 0
        %991 = vmatpush.bf16.xpose.msra.mxu0 0
        %992 = vmatpush.bf16.xpose.msra.mxu0 0
        %993 = vmatpush.bf16.xpose.msra.mxu0 0
        %994 = vmatpush.bf16.xpose.msra.mxu0 0
        %995 = vmatpush.bf16.xpose.msra.mxu0 0
        %996 = vmatpush.bf16.xpose.msra.mxu0 0
        %997 = vmatpush.bf16.xpose.msra.mxu0 0
        %998 = vmatpush.bf16.xpose.msra.mxu0 %v989
        %999 = vmatmul.bf16.gmra.mxu0 %v986
        %v1000 = vpop.f32.mrf.mxu0
        %v1001 = vadd.f32 0.0, %v1000
        %v1002 = vpop.f32.mrf.mxu0
        %1003 = vdwg.mxu0
        %v1004 = vld [vmem:[%s779] sm:$0x1]
        %vm1005 = vcmp.ne.f32.partialorder %v1004, 0.0
        %v1006 = vsel %vm1005, 1, 0
        %v1007 = vperm.slane %v1006, 0
        %vm1008 = vcmp.eq.s32.totalorder %v1007, 1
        %v1009 = vsel %vm1008, %v929, -1e+09
        %v1010 = vsel %vm1008, %v953, -1e+09
        %v1011 = vsel %vm1008, %v977, -1e+09
        %v1012 = vsel %vm1008, %v1001, -1e+09
        %v1013 = vsel %vm912, %v1009, -inf
        %1014 = vmax.xlane.f32.xlu0 %v1013
        %v1015 = vpop.xlane.xlu0 %1014
        %v1016 = vsel %vm912, %v1010, -inf
        %1017 = vmax.xlane.f32.xlu0 %v1016
        %v1018 = vpop.xlane.xlu0 %1017
        %v1019 = vsel %vm912, %v1011, -inf
        %1020 = vmax.xlane.f32.xlu0 %v1019
        %v1021 = vpop.xlane.xlu0 %1020
        %v1022 = vsel %vm912, %v1012, -inf
        %1023 = vmax.xlane.f32.xlu0 %v1022
        %v1024 = vpop.xlane.xlu0 %1023
        %v1025 = vsub.f32 %v1009, %v1015
        %v1026 = vsub.f32 %v1010, %v1018
        %v1027 = vsub.f32 %v1011, %v1021
        %v1028 = vsub.f32 %v1012, %v1024
        %v1029 = vmul.f32 %v1025, 1.442695
        %v1030 = vpow.pop %v1029
        %v1031 = vmul.f32 %v1026, 1.442695
        %v1032 = vpow.pop %v1031
        %v1033 = vmul.f32 %v1027, 1.442695
        %v1034 = vpow.pop %v1033
        %v1035 = vmul.f32 %v1028, 1.442695
        %v1036 = vpow.pop %v1035
        %v1037 = vsel %vm912, %v1030, 0.0
        %1038 = vadd.xlane.f32.xlu0 %v1037
        %v1039 = vpop.xlane.xlu0 %1038
        %v1040 = vsel %vm912, %v1032, 0.0
        %1041 = vadd.xlane.f32.xlu0 %v1040
        %v1042 = vpop.xlane.xlu0 %1041
        %v1043 = vsel %vm912, %v1034, 0.0
        %1044 = vadd.xlane.f32.xlu0 %v1043
        %v1045 = vpop.xlane.xlu0 %1044
        %v1046 = vsel %vm912, %v1036, 0.0
        %1047 = vadd.xlane.f32.xlu0 %v1046
        %v1048 = vpop.xlane.xlu0 %1047
        %v1049 = vrcp.pop %v1039
        %v1050 = vmul.f32 %v1039, %v1049
        %v1051 = vsub.f32 1.0, %v1050
        %v1052 = vmul.f32 %v1049, %v1051
        %v1053 = vadd.f32 %v1049, %v1052
        %vm1054 = vweird.f32 %v1039
        %vm1055 = vweird.f32 %v1049
        %vm1056 = vmor %vm1054, %vm1055
        %v1057 = vsel %vm1056, %v1049, %v1053
        %v1058 = vand.u32 2147483647, %v1039
        %vm1059 = vcmp.eq.f32.partialorder %v1058, 8.507059e+37
        %v1060 = vand.u32 %v1039, 2147483648
        %v1061 = vor.u32 1.1754944e-38, %v1060
        %v1062 = vsel %vm1059, %v1061, %v1057
        %v1063 = vmul.f32 %v1030, %v1062
        %v1064 = vrcp.pop %v1042
        %v1065 = vmul.f32 %v1042, %v1064
        %v1066 = vsub.f32 1.0, %v1065
        %v1067 = vmul.f32 %v1064, %v1066
        %v1068 = vadd.f32 %v1064, %v1067
        %vm1069 = vweird.f32 %v1042
        %vm1070 = vweird.f32 %v1064
        %vm1071 = vmor %vm1069, %vm1070
        %v1072 = vsel %vm1071, %v1064, %v1068
        %v1073 = vand.u32 2147483647, %v1042
        %vm1074 = vcmp.eq.f32.partialorder %v1073, 8.507059e+37
        %v1075 = vand.u32 %v1042, 2147483648
        %v1076 = vor.u32 1.1754944e-38, %v1075
        %v1077 = vsel %vm1074, %v1076, %v1072
        %v1078 = vmul.f32 %v1032, %v1077
        %v1079 = vrcp.pop %v1045
        %v1080 = vmul.f32 %v1045, %v1079
        %v1081 = vsub.f32 1.0, %v1080
        %v1082 = vmul.f32 %v1079, %v1081
        %v1083 = vadd.f32 %v1079, %v1082
        %vm1084 = vweird.f32 %v1045
        %vm1085 = vweird.f32 %v1079
        %vm1086 = vmor %vm1084, %vm1085
        %v1087 = vsel %vm1086, %v1079, %v1083
        %v1088 = vand.u32 2147483647, %v1045
        %vm1089 = vcmp.eq.f32.partialorder %v1088, 8.507059e+37
        %v1090 = vand.u32 %v1045, 2147483648
        %v1091 = vor.u32 1.1754944e-38, %v1090
        %v1092 = vsel %vm1089, %v1091, %v1087
        %v1093 = vmul.f32 %v1034, %v1092
        %v1094 = vrcp.pop %v1048
        %v1095 = vmul.f32 %v1048, %v1094
        %v1096 = vsub.f32 1.0, %v1095
        %v1097 = vmul.f32 %v1094, %v1096
        %v1098 = vadd.f32 %v1094, %v1097
        %vm1099 = vweird.f32 %v1048
        %vm1100 = vweird.f32 %v1094
        %vm1101 = vmor %vm1099, %vm1100
        %v1102 = vsel %vm1101, %v1094, %v1098
        %v1103 = vand.u32 2147483647, %v1048
        %vm1104 = vcmp.eq.f32.partialorder %v1103, 8.507059e+37
        %v1105 = vand.u32 %v1048, 2147483648
        %v1106 = vor.u32 1.1754944e-38, %v1105
        %v1107 = vsel %vm1104, %v1106, %v1102
        %v1108 = vmul.f32 %v1036, %v1107
        %v1109 = vpack.c.bf16 %v1063, %v1063
        %v1110 = vpack.c.bf16 %v1078, %v1078
        %v1111 = vpack.c.bf16 %v1093, %v1093
        %v1112 = vpack.c.bf16 %v1108, %v1108
        %1113 = vrot.lane.b32.xlu0 %v909, 64
        %v1114 = vpop.permute.xlu0 %1113
        %v1116 = vsel %vm912, %v1109, 0
        %vm1118 = vcmask 1043456
        %v1120 = vsel %vm1118, %v1114, 0
        %1122 = vmatpush.bf16.msra.mxu0 0
        %1123 = vmatpush.bf16.msra.mxu0 0
        %1124 = vmatpush.bf16.msra.mxu0 0
        %1125 = vmatpush.bf16.msra.mxu0 0
        %1126 = vmatpush.bf16.msra.mxu0 0
        %1127 = vmatpush.bf16.msra.mxu0 0
        %1128 = vmatpush.bf16.msra.mxu0 0
        %1129 = vmatpush.bf16.msra.mxu0 %v1120
        %1130 = vmatmul.bf16.gmra.mxu0 %v1116
        %v1131 = vpop.f32.mrf.mxu0
        %v1132 = vadd.f32 0.0, %v1131
        %v1133 = vpop.f32.mrf.mxu0
        %1134 = vdwg.mxu0
        %1135 = vrot.lane.b32.xlu0 %v934, 64
        %v1136 = vpop.permute.xlu0 %1135
        %v1138 = vsel %vm912, %v1110, 0
        %v1141 = vsel %vm1118, %v1136, 0
        %1143 = vmatpush.bf16.msra.mxu0 0
        %1144 = vmatpush.bf16.msra.mxu0 0
        %1145 = vmatpush.bf16.msra.mxu0 0
        %1146 = vmatpush.bf16.msra.mxu0 0
        %1147 = vmatpush.bf16.msra.mxu0 0
        %1148 = vmatpush.bf16.msra.mxu0 0
        %1149 = vmatpush.bf16.msra.mxu0 0
        %1150 = vmatpush.bf16.msra.mxu0 %v1141
        %1151 = vmatmul.bf16.gmra.mxu0 %v1138
        %v1152 = vpop.f32.mrf.mxu0
        %v1153 = vadd.f32 0.0, %v1152
        %v1154 = vpop.f32.mrf.mxu0
        %1155 = vdwg.mxu0
        %1156 = vrot.lane.b32.xlu0 %v958, 64
        %v1157 = vpop.permute.xlu0 %1156
        %v1159 = vsel %vm912, %v1111, 0
        %v1162 = vsel %vm1118, %v1157, 0
        %1164 = vmatpush.bf16.msra.mxu0 0
        %1165 = vmatpush.bf16.msra.mxu0 0
        %1166 = vmatpush.bf16.msra.mxu0 0
        %1167 = vmatpush.bf16.msra.mxu0 0
        %1168 = vmatpush.bf16.msra.mxu0 0
        %1169 = vmatpush.bf16.msra.mxu0 0
        %1170 = vmatpush.bf16.msra.mxu0 0
        %1171 = vmatpush.bf16.msra.mxu0 %v1162
        %1172 = vmatmul.bf16.gmra.mxu0 %v1159
        %v1173 = vpop.f32.mrf.mxu0
        %v1174 = vadd.f32 0.0, %v1173
        %v1175 = vpop.f32.mrf.mxu0
        %1176 = vdwg.mxu0
        %1177 = vrot.lane.b32.xlu0 %v982, 64
        %v1178 = vpop.permute.xlu0 %1177
        %v1180 = vsel %vm912, %v1112, 0
        %v1183 = vsel %vm1118, %v1178, 0
        %1185 = vmatpush.bf16.msra.mxu0 0
        %1186 = vmatpush.bf16.msra.mxu0 0
        %1187 = vmatpush.bf16.msra.mxu0 0
        %1188 = vmatpush.bf16.msra.mxu0 0
        %1189 = vmatpush.bf16.msra.mxu0 0
        %1190 = vmatpush.bf16.msra.mxu0 0
        %1191 = vmatpush.bf16.msra.mxu0 0
        %1192 = vmatpush.bf16.msra.mxu0 %v1183
        %1193 = vmatmul.bf16.gmra.mxu0 %v1180
        %v1194 = vpop.f32.mrf.mxu0
        %v1195 = vadd.f32 0.0, %v1194
        %v1196 = vpop.f32.mrf.mxu0
        %1197 = vdwg.mxu0
        %1199 = vrot.lane.b32.xlu0 %v1153, 8
        %v1200 = vpop.permute.xlu0 %1199
        %1203 = vrot.lane.b32.xlu0 %v1174, 16
        %v1204 = vpop.permute.xlu0 %1203
        %1207 = vrot.lane.b32.xlu0 %v1195, 24
        %v1208 = vpop.permute.xlu0 %1207
        %v1210 = vsel %vm912, %v1132, %v1200
        %vm1211 = vcmask 130048
        %v1212 = vsel %vm1211, %v1210, %v1204
        %vm1213 = vcmask 195584
        %v1214 = vsel %vm1213, %v1212, %v1208
        %v1215 = vld [vmem:[%s654] sm:$0xf]
        %v1216 = vld [vmem:[%s654 + $0x4] sm:$0xf]
        %v1217 = vld [vmem:[%s654 + $0x8] sm:$0xf]
        %v1218 = vld [vmem:[%s654 + $0xc] sm:$0xf]
        %v1219 = vpack.c.bf16 %v1214, %v1214
        %v1220 = vld [vmem:[%s791] sm:$0x1]
        %v1222 = vperm.slane %v1220, 0
        %v1228 = vunpack.c.l.b16 %v1215
        %v1229 = vunpack.c.l.b16 %v1216
        %v1230 = vunpack.c.l.b16 %v1217
        %v1231 = vunpack.c.l.b16 %v1218
        %v1232 = vpack.c.b16 %v1229, %v1228
        %v1233 = vpack.c.b16 %v1231, %v1230
        %v1237 = vsel %vm815, %v1219, 0
        %1239 = vmatpush.bf16.msra.mxu0 0
        %1240 = vmatpush.bf16.msra.mxu0 0
        %1241 = vmatpush.bf16.msra.mxu0 0
        %1242 = vmatpush.bf16.msra.mxu0 0
        %1243 = vmatpush.bf16.msra.mxu0 0
        %1244 = vmatpush.bf16.msra.mxu0 0
        %1245 = vmatpush.bf16.msra.mxu0 %v1233
        %1246 = vmatpush.bf16.msra.mxu0 %v1232
        %1247 = vmatmul.bf16.gmra.mxu0 %v1237
        %v1248 = vpop.f32.mrf.mxu0
        %v1249 = vadd.f32 %v1222, %v1248
        %v1250 = vpop.f32.mrf.mxu0
        %1251 = vdwg.mxu0
        %v1252 = vadd.f32 %v1249, %v812
        %v1253 = vld [vmem:[%s794] sm:$0x1]
        %v1254 = vld [vmem:[%s797] sm:$0x1]
        %v1255 = vsel %vm815, %v1252, 0.0
        %1256 = vadd.xlane.f32.xlu0 %v1255
        %v1257 = vpop.xlane.xlu0 %1256
        %v1258 = vmul.f32 %v1257, %v825
        %v1259 = vsub.f32 %v1252, %v1258
        %v1260 = vmul.f32 %v1259, %v1259
        %v1261 = vsel %vm815, %v1260, 0.0
        %1262 = vadd.xlane.f32.xlu0 %v1261
        %v1263 = vpop.xlane.xlu0 %1262
        %v1264 = vmul.f32 %v1263, 0.032258064
        %v1265 = vrsqrt.pop %v1264
        %v1266 = vmul.f32 %v1265, %v1264
        %v1267 = vmul.f32 %v1266, %v1265
        %v1268 = vmul.f32 0.5, %v1267
        %v1269 = vsub.f32 1.5, %v1268
        %v1270 = vmul.f32 %v1265, %v1269
        %v1271 = vmul.f32 %v1264, %v1270
        %vm1272 = vcmp.eq.f32.partialorder %v1264, inf
        %v1273 = vsel %vm1272, %v1264, %v1271
        %vm1274 = vcmp.eq.f32.partialorder %v1264, 0.0
        %v1275 = vand.u32 %v1264, 2147483648
        %v1276 = vsel %vm1274, %v1275, %v1273
        %v1277 = vadd.f32 %v1276, 1e-06
        %v1278 = vrcp.pop %v1277
        %v1279 = vmul.f32 %v1259, %v1278
        %v1281 = vperm.slane %v1253, 0
        %v1283 = vmul.f32 %v1281, %v1279
        %v1285 = vperm.slane %v1254, 0
        %v1287 = vadd.f32 %v1283, %v1285
        %v1288 = vld [vmem:[%s664] sm:$0xf]
        %v1289 = vld [vmem:[%s664 + $0x4] sm:$0xf]
        %v1290 = vld [vmem:[%s664 + $0x8] sm:$0xf]
        %v1291 = vld [vmem:[%s664 + $0xc] sm:$0xf]
        %v1292 = vpack.c.bf16 %v1287, %v1287
        %v1293 = vld [vmem:[%s800] sm:$0x1]
        %v1295 = vperm.slane %v1293, 0
        %v1301 = vunpack.c.l.b16 %v1288
        %v1302 = vunpack.c.l.b16 %v1289
        %v1303 = vunpack.c.l.b16 %v1290
        %v1304 = vunpack.c.l.b16 %v1291
        %v1305 = vpack.c.b16 %v1302, %v1301
        %v1306 = vpack.c.b16 %v1304, %v1303
        %v1310 = vsel %vm815, %v1292, 0
        %1312 = vmatpush.bf16.msra.mxu0 0
        %1313 = vmatpush.bf16.msra.mxu0 0
        %1314 = vmatpush.bf16.msra.mxu0 0
        %1315 = vmatpush.bf16.msra.mxu0 0
        %1316 = vmatpush.bf16.msra.mxu0 0
        %1317 = vmatpush.bf16.msra.mxu0 0
        %1318 = vmatpush.bf16.msra.mxu0 %v1306
        %1319 = vmatpush.bf16.msra.mxu0 %v1305
        %1320 = vmatmul.bf16.gmra.mxu0 %v1310
        %v1321 = vpop.f32.mrf.mxu0
        %v1322 = vadd.f32 %v1295, %v1321
        %v1323 = vpop.f32.mrf.mxu0
        %1324 = vdwg.mxu0
        %v1325 = vmax.f32 %v1322, 0.0
        %v1326 = vld [vmem:[%s674] sm:$0xf]
        %v1327 = vld [vmem:[%s674 + $0x4] sm:$0xf]
        %v1328 = vld [vmem:[%s674 + $0x8] sm:$0xf]
        %v1329 = vld [vmem:[%s674 + $0xc] sm:$0xf]
        %v1330 = vld [vmem:[%s674 + $0x10] sm:$0xf]
        %v1331 = vld [vmem:[%s674 + $0x14] sm:$0xf]
        %v1332 = vld [vmem:[%s674 + $0x18] sm:$0xf]
        %v1333 = vld [vmem:[%s674 + $0x1c] sm:$0xf]
        %v1334 = vpack.c.bf16 %v1325, %v1325
        %v1335 = vld [vmem:[%s803] sm:$0x1]
        %v1337 = vperm.slane %v1335, 0
        %v1347 = vunpack.c.l.b16 %v1326
        %v1348 = vunpack.c.l.b16 %v1327
        %v1349 = vunpack.c.l.b16 %v1328
        %v1350 = vunpack.c.l.b16 %v1329
        %v1351 = vunpack.c.l.b16 %v1330
        %v1352 = vunpack.c.l.b16 %v1331
        %v1353 = vunpack.c.l.b16 %v1332
        %v1354 = vunpack.c.l.b16 %v1333
        %v1355 = vpack.c.b16 %v1348, %v1347
        %v1356 = vpack.c.b16 %v1350, %v1349
        %v1357 = vpack.c.b16 %v1352, %v1351
        %v1358 = vpack.c.b16 %v1354, %v1353
        %vm1363 = vcmask 523264
        %v1365 = vsel %vm1363, %v1334, 0
        %1367 = vmatpush.bf16.msra.mxu0 0
        %1368 = vmatpush.bf16.msra.mxu0 0
        %1369 = vmatpush.bf16.msra.mxu0 0
        %1370 = vmatpush.bf16.msra.mxu0 0
        %1371 = vmatpush.bf16.msra.mxu0 %v1358
        %1372 = vmatpush.bf16.msra.mxu0 %v1357
        %1373 = vmatpush.bf16.msra.mxu0 %v1356
        %1374 = vmatpush.bf16.msra.mxu0 %v1355
        %1375 = vmatmul.bf16.gmra.mxu0 %v1365
        %v1376 = vpop.f32.mrf.mxu0
        %v1377 = vadd.f32 %v1337, %v1376
        %v1378 = vpop.f32.mrf.mxu0
        %1379 = vdwg.mxu0
        %v1380 = vadd.f32 %v1377, %v1252
        %1381 = vst.msk [vmem:[#allocation2] sm:$0xff] %vm815, %v1380
        %p1382 = scmp.eq.s32.totalorder %s47, 1
        // Predicated region
        $region97: #{_lambda_.3} parent=75 // pred_check
          %p1383 = pneg %p1382
        $region98: #{_lambda_.3} parent=75 // pred_check_branch
          %1385 = sbr.rel (%p1383) target = $region100
        $region99: #{_lambda_.3} parent=75 // pred_region
          %1386 = vst.msk [vmem:[%s765] sm:$0xff] %vm815, %v1380
          %1387 = vst.msk [vmem:[%s772] sm:$0xff] %vm912, %v1063
          %1388 = vst.msk [vmem:[%s772 + $0x8] sm:$0xff] %vm912, %v1078
          %1389 = vst.msk [vmem:[%s772 + $0x10] sm:$0xff] %vm912, %v1093
          %1390 = vst.msk [vmem:[%s772 + $0x18] sm:$0xff] %vm912, %v1108
        $region100: #{_lambda_.3} parent=75 // pred_fallthru
          _
        %s1391 = sand.u32 %s426, 1
        %s1392 = scalar_lea.sflag [#allocation5], %s1391
        %s1393 = sand.u32 %s426, 1
        %s1394 = smul.addr %s1393, 8
        %s1395 = scalar_lea.vmem [#allocation11], %s1394
        %s1396 = sand.u32 %s452, 1
        %s1397 = scalar_lea.sflag [#allocation13], %s1396
        %s1398 = sand.u32 %s452, 1
        %s1399 = smul.addr %s1398, 32
        %s1400 = scalar_lea.vmem [#allocation12], %s1399
        // Predicated region
        $region101: #{_lambda_.3} parent=75 // pred_check
          %p1401 = pneg %p436
        $region102: #{_lambda_.3} parent=75 // pred_check_branch
          %1403 = sbr.rel (%p1401) target = $region104
        $region103: #{_lambda_.3} parent=75 // pred_region
          %1405 = vsyncadd %s1392, 0
          %s1406 = smul.addr %s46, 8
          %s1407 = scalar_lea.hbm %s14, %s1406
          %s1409 = sshll.u32 %s1395, 4
          %s1410 = int_to_ptr.vmem [resolvable:$true] %s1409
          %s1411 = sshll.u32 %s1407, 4
          %s1412 = int_to_ptr.hbm [resolvable:$true] %s1411
          %1414 = dma.vmem_to_hbm [thread:$0]  %s1410, 128, %s1412, %s1392
        $region104: #{_lambda_.3} parent=75 // pred_fallthru
          _
        // Predicated region
        $region105: #{_lambda_.3} parent=75 // pred_check
          %p1415 = pneg %p462
        $region106: #{_lambda_.3} parent=75 // pred_check_branch
          %1417 = sbr.rel (%p1415) target = $region108
        $region107: #{_lambda_.3} parent=75 // pred_region
          %1419 = vsyncadd %s1397, 0
          %s1420 = smul.addr %s46, 4
          %s1421 = smul.addr %s1420, 8
          %s1422 = scalar_lea.hbm %s15, %s1421
          %s1423 = sshll.u32 %s1400, 4
          %s1424 = int_to_ptr.vmem [resolvable:$true] %s1423
          %s1425 = sshll.u32 %s1422, 4
          %s1426 = int_to_ptr.hbm [resolvable:$true] %s1425
          %1431 = dma.vmem_to_hbm [thread:$0]  %s1424, 512, %s1426, %s1397, 128, 128, 8
        $region108: #{_lambda_.3} parent=75 // pred_fallthru
          _
      $region76: #{_lambda_.3} parent=5 // pred_fallthru
        _
      %p1432 = scmp.le.s32.totalorder 2, %s37
      // Predicated region
      $region109: #{_lambda_.3} parent=5 // pred_check
        %p1433 = pneg %p1432
      $region110: #{_lambda_.3} parent=5 // pred_check_branch
        %1435 = sbr.rel (%p1433) target = $region112
      $region111: #{_lambda_.3} parent=5 // pred_region
        %s1436 = ssub.s32 %s37, 2
        // Predicated region
        $region113: #{_lambda_.3} parent=111 // pred_check
          %p1437 = pneg %p442
        $region114: #{_lambda_.3} parent=111 // pred_check_branch
          %1439 = sbr.rel (%p1437) target = $region116
        $region115: #{_lambda_.3} parent=111 // pred_region
          %s1440 = sand.u32 %s427, 1
          %s1441 = scalar_lea.sflag [#allocation5], %s1440
          %s1442 = sand.u32 %s427, 1
          %s1443 = smul.addr %s1442, 8
          %s1444 = scalar_lea.vmem [#allocation11], %s1443
          %1446 = dma.done %s1441, 128
        $region116: #{_lambda_.3} parent=111 // pred_fallthru
          _
        // Predicated region
        $region117: #{_lambda_.3} parent=111 // pred_check
          %p1447 = pneg %p468
        $region118: #{_lambda_.3} parent=111 // pred_check_branch
          %1449 = sbr.rel (%p1447) target = $region120
        $region119: #{_lambda_.3} parent=111 // pred_region
          %s1450 = sand.u32 %s453, 1
          %s1451 = scalar_lea.sflag [#allocation13], %s1450
          %s1452 = sand.u32 %s453, 1
          %s1453 = smul.addr %s1452, 32
          %s1454 = scalar_lea.vmem [#allocation12], %s1453
          %1456 = dma.done %s1451, 512
        $region120: #{_lambda_.3} parent=111 // pred_fallthru
          _
      $region112: #{_lambda_.3} parent=5 // pred_fallthru
        _
    $region6: #{_lambda_.3} parent=1 // loop_footer
      %s41 = sadd.s32 1, %s37
    $region7: #{_lambda_.3} parent=1 // loop_footer_branch
      %36 = sbr.rel target = $region3
    $region8: #{_lambda_.3} parent=1 // loop_exit
      _
    %1457 = vsyncpa [#allocation4], 1
    %s1458 = scalar_lea.sflag [#allocation4], 1
    %1459 = vsyncpa %s1458, 1
    %1460 = vsyncpa [#allocation7], 1
    %s1461 = scalar_lea.sflag [#allocation7], 1
    %1462 = vsyncpa %s1461, 1
    %1463 = vsyncpa [#allocation10], 1
    %s1464 = scalar_lea.sflag [#allocation10], 1
    %1465 = vsyncpa %s1464, 1
    %1466 = vsyncpa [#allocation5], 1
    %s1467 = scalar_lea.sflag [#allocation5], 1
    %1468 = vsyncpa %s1467, 1
    %1469 = vsyncpa [#allocation13], 1
    %s1470 = scalar_lea.sflag [#allocation13], 1
    %1471 = vsyncpa %s1470, 1

</llo_original>
